<compile_context>
chip_gen: v7x
topology: tpu7x:2x2x1
jax: 0.10.0
libtpu: 0.0.40
codegen_flags: <defaults>
</compile_context>

<pallas_src>
import jax
import jax.numpy as jnp
from jax import lax
from jax.experimental import pallas as pl
from jax.experimental.pallas import tpu as pltpu
import numpy as np


def bilstm_cnn_kernel(x_ref, len_ref,
                      w_in_ref, b_in_ref, whh_f_ref, whh_b_ref,
                      conv_w_ref, conv_b_ref,
                      out_w_ref, out_b_ref,
                      o_ref,
                      gin_ref, fwd_ref, bwd_ref):
    T, Bb, E = x_ref.shape
    H = whh_f_ref.shape[0]

    # ---- hoisted input projection for both directions (one big MXU matmul) --
    x2 = x_ref[...].reshape(T * Bb, E)
    gin = (jnp.dot(x2, w_in_ref[...], preferred_element_type=jnp.float32)
           + b_in_ref[...])                          # (T*Bb, 8H) = [fwd 4H | bwd 4H]
    gin_ref[...] = gin.reshape(T, Bb, 8 * H)

    # ---- zero the conv halo rows of the padded LSTM-output scratches --------
    zero_row = jnp.zeros((Bb, H), jnp.float32)
    fwd_ref[0] = zero_row
    fwd_ref[T + 1] = zero_row
    bwd_ref[0] = zero_row
    bwd_ref[T + 1] = zero_row

    # ---- interleaved bidirectional recurrence --------------------------------
    len_col = len_ref[...]                           # (Bb, 1) int32
    whh_f = whh_f_ref[...]                           # (H, 4H), hoisted loads
    whh_b = whh_b_ref[...]

    def cell(gates, c_prev):                         # PyTorch gate order i,f,g,o
        i_g = jax.nn.sigmoid(gates[:, 0 * H:1 * H])
        f_g = jax.nn.sigmoid(gates[:, 1 * H:2 * H])
        g_g = jnp.tanh(gates[:, 2 * H:3 * H])
        o_g = jax.nn.sigmoid(gates[:, 3 * H:4 * H])
        c_new = f_g * c_prev + i_g * g_g
        h_new = o_g * jnp.tanh(c_new)
        return h_new, c_new

    def step(j, carry):
        hf, cf, hb, cb = carry
        tf = j
        tb = T - 1 - j
        mf = (tf < len_col).astype(jnp.float32)      # (Bb, 1)
        mb = (tb < len_col).astype(jnp.float32)
        g_f = gin_ref[tf][:, :4 * H] + jnp.dot(hf, whh_f,
                                               preferred_element_type=jnp.float32)
        g_b = gin_ref[tb][:, 4 * H:] + jnp.dot(hb, whh_b,
                                               preferred_element_type=jnp.float32)
        hf_new, cf_new = cell(g_f, cf)
        hb_new, cb_new = cell(g_b, cb)
        # packed-sequence semantics: padded steps emit 0 and keep the state.
        fwd_ref[tf + 1] = mf * hf_new
        bwd_ref[tb + 1] = mb * hb_new
        hf = mf * hf_new + (1.0 - mf) * hf
        cf = mf * cf_new + (1.0 - mf) * cf
        hb = mb * hb_new + (1.0 - mb) * hb
        cb = mb * cb_new + (1.0 - mb) * cb
        return (hf, cf, hb, cb)

    z = jnp.zeros((Bb, H), jnp.float32)
    lax.fori_loop(0, T, step, (z, z, z, z))

    # ---- Conv1d(2H->H, k=3, pad=1) as ONE fused (T*Bb,6H)@(6H,H) matmul ------
    fp = fwd_ref[...]                                # (T+2, Bb, H)
    bp = bwd_ref[...]
    cat = jnp.concatenate(
        [fp[0:T], fp[1:T + 1], fp[2:T + 2],
         bp[0:T], bp[1:T + 1], bp[2:T + 2]], axis=-1)            # (T, Bb, 6H)
    y = (jnp.dot(cat.reshape(T * Bb, 6 * H), conv_w_ref[...],
                 preferred_element_type=jnp.float32)
         + conv_b_ref[...])                                      # (T*Bb, H)

    # ---- ReLU, masked_fill(t >= length, -1), max over time -------------------
    y = jnp.maximum(y, 0.0).reshape(T, Bb, H)
    t_iota = lax.broadcasted_iota(jnp.int32, (T, Bb, 1), 0)
    valid = t_iota < len_col[None, :, :]                         # (T, Bb, 1)
    y = jnp.where(valid, y, -1.0)
    pooled = jnp.max(y, axis=0)                                  # (Bb, H)

    # ---- output Linear(H -> C_pad) --------------------------------------------
    o_ref[...] = (jnp.dot(pooled, out_w_ref[...],
                          preferred_element_type=jnp.float32)
                  + out_b_ref[...])                              # (Bb, C_pad)


def _pick_b_block(B):
    if B <= 8:
        return B
    for cand in (128, 64, 32, 16, 8):
        if B % cand == 0:
            return cand
    return B


def _padded_f32_bytes(*shape):
    """f32 bytes after (8, 128) sublane/lane padding of the last two dims."""
    if len(shape) == 1:
        shape = (1,) + tuple(shape)
    lead = int(np.prod(shape[:-2])) if len(shape) > 2 else 1
    sub = -(-int(shape[-2]) // 8) * 8
    lane = -(-int(shape[-1]) // 128) * 128
    return lead * sub * lane * 4


def bilstm_cnn_forward(src, lengths, params):
    """src: (T, B) int32 token ids; lengths: (B,) int32 valid timesteps."""
    T, B = src.shape
    E = params["embed"].shape[1]
    H = params["whh_f"].shape[0]
    C = params["out_w"].shape[1]
    C_pad = ((C + 127) // 128) * 128

    # Glue outside the kernel: embedding gather (token-id lookup has no clean
    # rectangular-tile Pallas equivalent) and length vector; dropout = identity.
    x_emb = params["embed"][src].astype(jnp.float32)             # (T, B, E)
    len2d = lengths.reshape(B, 1).astype(jnp.int32)              # (B, 1)

    # Host-side, one-time fused weight layouts.
    w_in = jnp.concatenate([params["wih_f"], params["wih_b"]], axis=1)   # (E, 8H)
    b_in = jnp.concatenate([params["b_f"], params["b_b"]], axis=1)       # (1, 8H)
    # conv weight: PyTorch (H, 2H, 3) -> (6H, H), tap-major within direction,
    # matching the in-kernel operand [fwd t-1,t,t+1 | bwd t-1,t,t+1].
    cw = jnp.transpose(params["conv_w"], (2, 1, 0))               # (3, 2H, H)
    conv_w = jnp.concatenate([cw[:, :H, :].reshape(3 * H, H),
                              cw[:, H:, :].reshape(3 * H, H)], axis=0)   # (6H, H)
    out_w = jnp.zeros((H, C_pad), jnp.float32).at[:, :C].set(params["out_w"])
    out_b = jnp.zeros((1, C_pad), jnp.float32).at[:, :C].set(params["out_b"])

    b_blk = _pick_b_block(B)
    grid = (B // b_blk,)

    def full2d(arr):
        return pl.BlockSpec(arr.shape, lambda b: (0, 0))

    in_specs = [
        pl.BlockSpec((T, b_blk, E), lambda b: (0, b, 0)),         # x_emb
        pl.BlockSpec((b_blk, 1), lambda b: (b, 0)),               # lengths
        full2d(w_in), full2d(b_in),
        full2d(params["whh_f"]), full2d(params["whh_b"]),
        full2d(conv_w), full2d(params["conv_b"]),
        full2d(out_w), full2d(out_b),
    ]
    out_spec = pl.BlockSpec((b_blk, C_pad), lambda b: (b, 0))

    scratch = [
        pltpu.VMEM((T, b_blk, 8 * H), jnp.float32),      # hoisted gate inputs
        pltpu.VMEM((T + 2, b_blk, H), jnp.float32),      # fwd outputs (+halo)
        pltpu.VMEM((T + 2, b_blk, H), jnp.float32),      # bwd outputs (+halo)
    ]

    # VMEM budget: double-buffered IO blocks + weights + scratch + conv/pool
    # intermediates, 2x headroom, capped below v7x's 64 MiB physical VMEM.
    pf = _padded_f32_bytes
    block_bytes = (
        2 * (pf(T, b_blk, E) + pf(b_blk, 1) + pf(b_blk, C_pad))
        + pf(E, 8 * H) + pf(1, 8 * H) + 2 * pf(H, 4 * H)
        + pf(6 * H, H) + pf(1, H) + pf(H, C_pad) + pf(1, C_pad)
        + pf(T, b_blk, 8 * H) + 2 * pf(T + 2, b_blk, H)
        + pf(T, b_blk, 6 * H) + 2 * pf(T, b_blk, H)
    )
    vmem_limit = int(min(48 * 2**20, max(16 * 2**20, 2 * block_bytes)))

    logits_pad = pl.pallas_call(
        bilstm_cnn_kernel,
        out_shape=jax.ShapeDtypeStruct((B, C_pad), jnp.float32),
        grid_spec=pltpu.PrefetchScalarGridSpec(
            num_scalar_prefetch=0,
            grid=grid,
            in_specs=in_specs,
            out_specs=out_spec,
            scratch_shapes=scratch),
        compiler_params=pltpu.CompilerParams(
            dimension_semantics=("parallel",),
            vmem_limit_bytes=vmem_limit),
    )(x_emb, len2d, w_in, b_in, params["whh_f"], params["whh_b"],
      conv_w, params["conv_b"], out_w, out_b)

    return logits_pad[:, :C]


def init_params(key, v_size, e_size, h_size, c_size):
    ks = jax.random.split(key, 12)
    u = lambda k, shape: jax.random.uniform(k, shape, jnp.float32, -0.1, 0.1)
    H = h_size
    return {
        "embed": u(ks[0], (v_size, e_size)),
        # LSTM weights stored transposed vs PyTorch: (in_features, 4H)
        "wih_f": u(ks[1], (e_size, 4 * H)),
        "whh_f": u(ks[2], (H, 4 * H)),
        "b_f": u(ks[3], (1, 4 * H)) + u(ks[4], (1, 4 * H)),   # b_ih + b_hh
        "wih_b": u(ks[5], (e_size, 4 * H)),
        "whh_b": u(ks[6], (H, 4 * H)),
        "b_b": u(ks[7], (1, 4 * H)) + u(ks[8], (1, 4 * H)),
        # conv weight in PyTorch layout (H_out, 2H, 3), kaiming-normal-ish
        "conv_w": jax.random.normal(ks[9], (H, 2 * H, 3), jnp.float32)
                  * np.sqrt(2.0 / (2 * H * 3)),
        "conv_b": jnp.zeros((1, H), jnp.float32),
        # out weight transposed vs PyTorch: (H, C)
        "out_w": jax.random.normal(ks[10], (h_size, c_size), jnp.float32)
                 * np.sqrt(2.0 / h_size),
        "out_b": jnp.zeros((1, c_size), jnp.float32),
    }


if __name__ == "__main__":
    V, E, H, C = 50, 32, 32, 8
    T, B = 8, 2

    key = jax.random.PRNGKey(0)
    k_param, k_src = jax.random.split(key)
    params = init_params(k_param, V, E, H, C)

    src = jax.random.randint(k_src, (T, B), 0, V, dtype=jnp.int32)   # (T, B)
    lengths = jnp.array([8, 5], dtype=jnp.int32)                     # sorted desc

    logits = bilstm_cnn_forward(src, lengths, params)
    jax.block_until_ready(logits)
    assert logits.shape == (B, C)
    print("KERNEL_OK")
</pallas_src>

<mosaic_0001>
module attributes {stable_mosaic.version = 11 : i64} {
  func.func @bilstm_cnn_kernel(%arg0: i32, %arg1: memref<8x2x32xf32, #tpu.memory_space<vmem>>, %arg2: memref<2x1xi32, #tpu.memory_space<vmem>>, %arg3: memref<32x256xf32, #tpu.memory_space<vmem>>, %arg4: memref<1x256xf32, #tpu.memory_space<vmem>>, %arg5: memref<32x128xf32, #tpu.memory_space<vmem>>, %arg6: memref<32x128xf32, #tpu.memory_space<vmem>>, %arg7: memref<192x32xf32, #tpu.memory_space<vmem>>, %arg8: memref<1x32xf32, #tpu.memory_space<vmem>>, %arg9: memref<32x128xf32, #tpu.memory_space<vmem>>, %arg10: memref<1x128xf32, #tpu.memory_space<vmem>>, %arg11: memref<2x128xf32, #tpu.memory_space<vmem>>, %arg12: memref<8x2x256xf32, #tpu.memory_space<vmem>>, %arg13: memref<10x2x32xf32, #tpu.memory_space<vmem>>, %arg14: memref<10x2x32xf32, #tpu.memory_space<vmem>>) attributes {dimension_semantics = [#tpu.dimension_semantics<parallel>], iteration_bounds = array<i64: 1>, scalar_prefetch = 0 : i64, scratch_operands = 3 : i64, tpu.core_type = #tpu.core_type<tc>, window_params = [{transform_indices = @transform_0, window_bounds = array<i64: 8, 2, 32>}, {transform_indices = @transform_1, window_bounds = array<i64: 2, 1>}, {pipeline_mode = #tpu.pipeline_mode<synchronous>, transform_indices = @transform_2, window_bounds = array<i64: 32, 256>}, {pipeline_mode = #tpu.pipeline_mode<synchronous>, transform_indices = @transform_3, window_bounds = array<i64: 1, 256>}, {pipeline_mode = #tpu.pipeline_mode<synchronous>, transform_indices = @transform_4, window_bounds = array<i64: 32, 128>}, {pipeline_mode = #tpu.pipeline_mode<synchronous>, transform_indices = @transform_5, window_bounds = array<i64: 32, 128>}, {pipeline_mode = #tpu.pipeline_mode<synchronous>, transform_indices = @transform_6, window_bounds = array<i64: 192, 32>}, {pipeline_mode = #tpu.pipeline_mode<synchronous>, transform_indices = @transform_7, window_bounds = array<i64: 1, 32>}, {pipeline_mode = #tpu.pipeline_mode<synchronous>, transform_indices = @transform_8, window_bounds = array<i64: 32, 128>}, {pipeline_mode = #tpu.pipeline_mode<synchronous>, transform_indices = @transform_9, window_bounds = array<i64: 1, 128>}, {transform_indices = @transform_10, window_bounds = array<i64: 2, 128>}]} {
    %c0 = arith.constant 0 : index
    %c0_0 = arith.constant 0 : index
    %c0_1 = arith.constant 0 : index
    %0 = vector.load %arg1[%c0, %c0_0, %c0_1] : memref<8x2x32xf32, #tpu.memory_space<vmem>>, vector<8x2x32xf32>
    %1 = vector.shape_cast %0 : vector<8x2x32xf32> to vector<16x32xf32>
    %c0_2 = arith.constant 0 : index
    %c0_3 = arith.constant 0 : index
    %2 = vector.load %arg3[%c0_2, %c0_3] : memref<32x256xf32, #tpu.memory_space<vmem>>, vector<32x256xf32>
    %cst = arith.constant dense<0.000000e+00> : vector<16x256xf32>
    %3 = tpu.matmul %1, %2, %cst {dimension_numbers = #tpu.dot_dimension_numbers<[1], [0], [0], [1], [0, 0, 1, 1], [], []>} : vector<16x32xf32>, vector<32x256xf32>, vector<16x256xf32> -> vector<16x256xf32>
    %c0_4 = arith.constant 0 : index
    %c0_5 = arith.constant 0 : index
    %4 = vector.load %arg4[%c0_4, %c0_5] : memref<1x256xf32, #tpu.memory_space<vmem>>, vector<1x256xf32>
    %5 = vector.broadcast %4 : vector<1x256xf32> to vector<16x256xf32>
    %6 = arith.addf %3, %5 : vector<16x256xf32>
    %7 = vector.shape_cast %6 : vector<16x256xf32> to vector<8x2x256xf32>
    %c0_6 = arith.constant 0 : index
    %c0_7 = arith.constant 0 : index
    %c0_8 = arith.constant 0 : index
    %8 = vector.load %arg12[%c0_6, %c0_7, %c0_8] : memref<8x2x256xf32, #tpu.memory_space<vmem>>, vector<8x2x256xf32>
    tpu.vector_store %arg12[%c0_6, %c0_7, %c0_8], %7 {strides = array<i32>} : memref<8x2x256xf32, #tpu.memory_space<vmem>>, vector<8x2x256xf32>,
    %cst_9 = arith.constant 0.000000e+00 : f32
    %9 = vector.broadcast %cst_9 : f32 to vector<2x32xf32>
    %c0_10 = arith.constant 0 : index
    %c0_11 = arith.constant 0 : index
    %c0_12 = arith.constant 0 : index
    %10 = vector.load %arg13[%c0_10, %c0_11, %c0_12] : memref<10x2x32xf32, #tpu.memory_space<vmem>>, vector<1x2x32xf32>
    %11 = vector.shape_cast %10 : vector<1x2x32xf32> to vector<2x32xf32>
    %12 = vector.shape_cast %9 : vector<2x32xf32> to vector<1x2x32xf32>
    tpu.vector_store %arg13[%c0_10, %c0_11, %c0_12], %12 {strides = array<i32>} : memref<10x2x32xf32, #tpu.memory_space<vmem>>, vector<1x2x32xf32>,
    %c9 = arith.constant 9 : index
    %c0_13 = arith.constant 0 : index
    %c0_14 = arith.constant 0 : index
    %13 = vector.load %arg13[%c9, %c0_13, %c0_14] : memref<10x2x32xf32, #tpu.memory_space<vmem>>, vector<1x2x32xf32>
    %14 = vector.shape_cast %13 : vector<1x2x32xf32> to vector<2x32xf32>
    %15 = vector.shape_cast %9 : vector<2x32xf32> to vector<1x2x32xf32>
    tpu.vector_store %arg13[%c9, %c0_13, %c0_14], %15 {strides = array<i32>} : memref<10x2x32xf32, #tpu.memory_space<vmem>>, vector<1x2x32xf32>,
    %c0_15 = arith.constant 0 : index
    %c0_16 = arith.constant 0 : index
    %c0_17 = arith.constant 0 : index
    %16 = vector.load %arg14[%c0_15, %c0_16, %c0_17] : memref<10x2x32xf32, #tpu.memory_space<vmem>>, vector<1x2x32xf32>
    %17 = vector.shape_cast %16 : vector<1x2x32xf32> to vector<2x32xf32>
    %18 = vector.shape_cast %9 : vector<2x32xf32> to vector<1x2x32xf32>
    tpu.vector_store %arg14[%c0_15, %c0_16, %c0_17], %18 {strides = array<i32>} : memref<10x2x32xf32, #tpu.memory_space<vmem>>, vector<1x2x32xf32>,
    %c9_18 = arith.constant 9 : index
    %c0_19 = arith.constant 0 : index
    %c0_20 = arith.constant 0 : index
    %19 = vector.load %arg14[%c9_18, %c0_19, %c0_20] : memref<10x2x32xf32, #tpu.memory_space<vmem>>, vector<1x2x32xf32>
    %20 = vector.shape_cast %19 : vector<1x2x32xf32> to vector<2x32xf32>
    %21 = vector.shape_cast %9 : vector<2x32xf32> to vector<1x2x32xf32>
    tpu.vector_store %arg14[%c9_18, %c0_19, %c0_20], %21 {strides = array<i32>} : memref<10x2x32xf32, #tpu.memory_space<vmem>>, vector<1x2x32xf32>,
    %c0_21 = arith.constant 0 : index
    %c0_22 = arith.constant 0 : index
    %22 = vector.load %arg2[%c0_21, %c0_22] : memref<2x1xi32, #tpu.memory_space<vmem>>, vector<2x1xi32>
    %c0_23 = arith.constant 0 : index
    %c0_24 = arith.constant 0 : index
    %23 = vector.load %arg5[%c0_23, %c0_24] : memref<32x128xf32, #tpu.memory_space<vmem>>, vector<32x128xf32>
    %c0_25 = arith.constant 0 : index
    %c0_26 = arith.constant 0 : index
    %24 = vector.load %arg6[%c0_25, %c0_26] : memref<32x128xf32, #tpu.memory_space<vmem>>, vector<32x128xf32>
    %cst_27 = arith.constant 0.000000e+00 : f32
    %25 = vector.broadcast %cst_27 : f32 to vector<2x32xf32>
    %c0_i32 = arith.constant 0 : i32
    %c8_i32 = arith.constant 8 : i32
    %26 = arith.addi %c0_i32, %c8_i32 : i32
    %c1_i32 = arith.constant 1 : i32
    %27:4 = scf.for %arg15 = %c0_i32 to %26 step %c1_i32 iter_args(%arg16 = %25, %arg17 = %25, %arg18 = %25, %arg19 = %25) -> (vector<2x32xf32>, vector<2x32xf32>, vector<2x32xf32>, vector<2x32xf32>)  : i32 {
      %c7_i32 = arith.constant 7 : i32
      %61 = arith.subi %c7_i32, %arg15 : i32
      %62 = vector.broadcast %arg15 : i32 to vector<2x1xi32>
      %63 = arith.cmpi slt, %62, %22 : vector<2x1xi32>
      %64 = arith.extui %63 : vector<2x1xi1> to vector<2x1xi32>
      %65 = arith.sitofp %64 : vector<2x1xi32> to vector<2x1xf32>
      %66 = vector.broadcast %61 : i32 to vector<2x1xi32>
      %67 = arith.cmpi slt, %66, %22 : vector<2x1xi32>
      %68 = arith.extui %67 : vector<2x1xi1> to vector<2x1xi32>
      %69 = arith.sitofp %68 : vector<2x1xi32> to vector<2x1xf32>
      %70 = arith.index_cast %arg15 : i32 to index
      %c0_50 = arith.constant 0 : index
      %c0_51 = arith.constant 0 : index
      %71 = vector.load %arg12[%70, %c0_50, %c0_51] : memref<8x2x256xf32, #tpu.memory_space<vmem>>, vector<1x2x256xf32>
      %72 = vector.shape_cast %71 : vector<1x2x256xf32> to vector<2x256xf32>
      %73 = vector.extract_strided_slice %72 {offsets = [0, 0], sizes = [2, 128], strides = [1, 1]} : vector<2x256xf32> to vector<2x128xf32>
      %cst_52 = arith.constant dense<0.000000e+00> : vector<2x128xf32>
      %74 = tpu.matmul %arg16, %23, %cst_52 {dimension_numbers = #tpu.dot_dimension_numbers<[1], [0], [0], [1], [0, 0, 1, 1], [], []>} : vector<2x32xf32>, vector<32x128xf32>, vector<2x128xf32> -> vector<2x128xf32>
      %75 = arith.addf %73, %74 : vector<2x128xf32>
      %76 = arith.index_cast %61 : i32 to index
      %c0_53 = arith.constant 0 : index
      %c0_54 = arith.constant 0 : index
      %77 = vector.load %arg12[%76, %c0_53, %c0_54] : memref<8x2x256xf32, #tpu.memory_space<vmem>>, vector<1x2x256xf32>
      %78 = vector.shape_cast %77 : vector<1x2x256xf32> to vector<2x256xf32>
      %79 = vector.extract_strided_slice %78 {offsets = [0, 128], sizes = [2, 128], strides = [1, 1]} : vector<2x256xf32> to vector<2x128xf32>
      %cst_55 = arith.constant dense<0.000000e+00> : vector<2x128xf32>
      %80 = tpu.matmul %arg18, %24, %cst_55 {dimension_numbers = #tpu.dot_dimension_numbers<[1], [0], [0], [1], [0, 0, 1, 1], [], []>} : vector<2x32xf32>, vector<32x128xf32>, vector<2x128xf32> -> vector<2x128xf32>
      %81 = arith.addf %79, %80 : vector<2x128xf32>
      %82 = vector.extract_strided_slice %75 {offsets = [0, 0], sizes = [2, 32], strides = [1, 1]} : vector<2x128xf32> to vector<2x32xf32>
      %83 = arith.negf %82 : vector<2x32xf32>
      %84 = math.exp %83 : vector<2x32xf32>
      %cst_56 = arith.constant 1.000000e+00 : f32
      %85 = vector.broadcast %cst_56 : f32 to vector<2x32xf32>
      %86 = arith.addf %85, %84 : vector<2x32xf32>
      %87 = arith.divf %85, %86 : vector<2x32xf32>
      %88 = vector.extract_strided_slice %75 {offsets = [0, 32], sizes = [2, 32], strides = [1, 1]} : vector<2x128xf32> to vector<2x32xf32>
      %89 = arith.negf %88 : vector<2x32xf32>
      %90 = math.exp %89 : vector<2x32xf32>
      %cst_57 = arith.constant 1.000000e+00 : f32
      %91 = vector.broadcast %cst_57 : f32 to vector<2x32xf32>
      %92 = arith.addf %91, %90 : vector<2x32xf32>
      %93 = arith.divf %91, %92 : vector<2x32xf32>
      %94 = vector.extract_strided_slice %75 {offsets = [0, 64], sizes = [2, 32], strides = [1, 1]} : vector<2x128xf32> to vector<2x32xf32>
      %95 = math.tanh %94 : vector<2x32xf32>
      %96 = vector.extract_strided_slice %75 {offsets = [0, 96], sizes = [2, 32], strides = [1, 1]} : vector<2x128xf32> to vector<2x32xf32>
      %97 = arith.negf %96 : vector<2x32xf32>
      %98 = math.exp %97 : vector<2x32xf32>
      %cst_58 = arith.constant 1.000000e+00 : f32
      %99 = vector.broadcast %cst_58 : f32 to vector<2x32xf32>
      %100 = arith.addf %99, %98 : vector<2x32xf32>
      %101 = arith.divf %99, %100 : vector<2x32xf32>
      %102 = arith.mulf %93, %arg17 : vector<2x32xf32>
      %103 = arith.mulf %87, %95 : vector<2x32xf32>
      %104 = arith.addf %102, %103 : vector<2x32xf32>
      %105 = math.tanh %104 : vector<2x32xf32>
      %106 = arith.mulf %101, %105 : vector<2x32xf32>
      %107 = vector.extract_strided_slice %81 {offsets = [0, 0], sizes = [2, 32], strides = [1, 1]} : vector<2x128xf32> to vector<2x32xf32>
      %108 = arith.negf %107 : vector<2x32xf32>
      %109 = math.exp %108 : vector<2x32xf32>
      %cst_59 = arith.constant 1.000000e+00 : f32
      %110 = vector.broadcast %cst_59 : f32 to vector<2x32xf32>
      %111 = arith.addf %110, %109 : vector<2x32xf32>
      %112 = arith.divf %110, %111 : vector<2x32xf32>
      %113 = vector.extract_strided_slice %81 {offsets = [0, 32], sizes = [2, 32], strides = [1, 1]} : vector<2x128xf32> to vector<2x32xf32>
      %114 = arith.negf %113 : vector<2x32xf32>
      %115 = math.exp %114 : vector<2x32xf32>
      %cst_60 = arith.constant 1.000000e+00 : f32
      %116 = vector.broadcast %cst_60 : f32 to vector<2x32xf32>
      %117 = arith.addf %116, %115 : vector<2x32xf32>
      %118 = arith.divf %116, %117 : vector<2x32xf32>
      %119 = vector.extract_strided_slice %81 {offsets = [0, 64], sizes = [2, 32], strides = [1, 1]} : vector<2x128xf32> to vector<2x32xf32>
      %120 = math.tanh %119 : vector<2x32xf32>
      %121 = vector.extract_strided_slice %81 {offsets = [0, 96], sizes = [2, 32], strides = [1, 1]} : vector<2x128xf32> to vector<2x32xf32>
      %122 = arith.negf %121 : vector<2x32xf32>
      %123 = math.exp %122 : vector<2x32xf32>
      %cst_61 = arith.constant 1.000000e+00 : f32
      %124 = vector.broadcast %cst_61 : f32 to vector<2x32xf32>
      %125 = arith.addf %124, %123 : vector<2x32xf32>
      %126 = arith.divf %124, %125 : vector<2x32xf32>
      %127 = arith.mulf %118, %arg19 : vector<2x32xf32>
      %128 = arith.mulf %112, %120 : vector<2x32xf32>
      %129 = arith.addf %127, %128 : vector<2x32xf32>
      %130 = math.tanh %129 : vector<2x32xf32>
      %131 = arith.mulf %126, %130 : vector<2x32xf32>
      %132 = vector.broadcast %65 : vector<2x1xf32> to vector<2x32xf32>
      %133 = arith.mulf %132, %106 : vector<2x32xf32>
      %c1_i32_62 = arith.constant 1 : i32
      %134 = arith.addi %arg15, %c1_i32_62 : i32
      %135 = arith.index_cast %134 : i32 to index
      %c0_63 = arith.constant 0 : index
      %c0_64 = arith.constant 0 : index
      %136 = vector.load %arg13[%135, %c0_63, %c0_64] : memref<10x2x32xf32, #tpu.memory_space<vmem>>, vector<1x2x32xf32>
      %137 = vector.shape_cast %136 : vector<1x2x32xf32> to vector<2x32xf32>
      %138 = vector.shape_cast %133 : vector<2x32xf32> to vector<1x2x32xf32>
      tpu.vector_store %arg13[%135, %c0_63, %c0_64], %138 {strides = array<i32>} : memref<10x2x32xf32, #tpu.memory_space<vmem>>, vector<1x2x32xf32>,
      %139 = vector.broadcast %69 : vector<2x1xf32> to vector<2x32xf32>
      %140 = arith.mulf %139, %131 : vector<2x32xf32>
      %c1_i32_65 = arith.constant 1 : i32
      %141 = arith.addi %61, %c1_i32_65 : i32
      %142 = arith.index_cast %141 : i32 to index
      %c0_66 = arith.constant 0 : index
      %c0_67 = arith.constant 0 : index
      %143 = vector.load %arg14[%142, %c0_66, %c0_67] : memref<10x2x32xf32, #tpu.memory_space<vmem>>, vector<1x2x32xf32>
      %144 = vector.shape_cast %143 : vector<1x2x32xf32> to vector<2x32xf32>
      %145 = vector.shape_cast %140 : vector<2x32xf32> to vector<1x2x32xf32>
      tpu.vector_store %arg14[%142, %c0_66, %c0_67], %145 {strides = array<i32>} : memref<10x2x32xf32, #tpu.memory_space<vmem>>, vector<1x2x32xf32>,
      %146 = vector.broadcast %65 : vector<2x1xf32> to vector<2x32xf32>
      %147 = arith.mulf %146, %106 : vector<2x32xf32>
      %cst_68 = arith.constant 1.000000e+00 : f32
      %148 = vector.broadcast %cst_68 : f32 to vector<2x1xf32>
      %149 = arith.subf %148, %65 : vector<2x1xf32>
      %150 = vector.broadcast %149 : vector<2x1xf32> to vector<2x32xf32>
      %151 = arith.mulf %150, %arg16 : vector<2x32xf32>
      %152 = arith.addf %147, %151 : vector<2x32xf32>
      %153 = vector.broadcast %65 : vector<2x1xf32> to vector<2x32xf32>
      %154 = arith.mulf %153, %104 : vector<2x32xf32>
      %cst_69 = arith.constant 1.000000e+00 : f32
      %155 = vector.broadcast %cst_69 : f32 to vector<2x1xf32>
      %156 = arith.subf %155, %65 : vector<2x1xf32>
      %157 = vector.broadcast %156 : vector<2x1xf32> to vector<2x32xf32>
      %158 = arith.mulf %157, %arg17 : vector<2x32xf32>
      %159 = arith.addf %154, %158 : vector<2x32xf32>
      %160 = vector.broadcast %69 : vector<2x1xf32> to vector<2x32xf32>
      %161 = arith.mulf %160, %131 : vector<2x32xf32>
      %cst_70 = arith.constant 1.000000e+00 : f32
      %162 = vector.broadcast %cst_70 : f32 to vector<2x1xf32>
      %163 = arith.subf %162, %69 : vector<2x1xf32>
      %164 = vector.broadcast %163 : vector<2x1xf32> to vector<2x32xf32>
      %165 = arith.mulf %164, %arg18 : vector<2x32xf32>
      %166 = arith.addf %161, %165 : vector<2x32xf32>
      %167 = vector.broadcast %69 : vector<2x1xf32> to vector<2x32xf32>
      %168 = arith.mulf %167, %129 : vector<2x32xf32>
      %cst_71 = arith.constant 1.000000e+00 : f32
      %169 = vector.broadcast %cst_71 : f32 to vector<2x1xf32>
      %170 = arith.subf %169, %69 : vector<2x1xf32>
      %171 = vector.broadcast %170 : vector<2x1xf32> to vector<2x32xf32>
      %172 = arith.mulf %171, %arg19 : vector<2x32xf32>
      %173 = arith.addf %168, %172 : vector<2x32xf32>
      scf.yield %152, %159, %166, %173 : vector<2x32xf32>, vector<2x32xf32>, vector<2x32xf32>, vector<2x32xf32>
    }
    %c8_i32_28 = arith.constant 8 : i32
    %c0_29 = arith.constant 0 : index
    %c0_30 = arith.constant 0 : index
    %c0_31 = arith.constant 0 : index
    %28 = vector.load %arg13[%c0_29, %c0_30, %c0_31] : memref<10x2x32xf32, #tpu.memory_space<vmem>>, vector<10x2x32xf32>
    %c0_32 = arith.constant 0 : index
    %c0_33 = arith.constant 0 : index
    %c0_34 = arith.constant 0 : index
    %29 = vector.load %arg14[%c0_32, %c0_33, %c0_34] : memref<10x2x32xf32, #tpu.memory_space<vmem>>, vector<10x2x32xf32>
    %30 = vector.extract_strided_slice %28 {offsets = [0, 0, 0], sizes = [8, 2, 32], strides = [1, 1, 1]} : vector<10x2x32xf32> to vector<8x2x32xf32>
    %31 = vector.extract_strided_slice %28 {offsets = [1, 0, 0], sizes = [8, 2, 32], strides = [1, 1, 1]} : vector<10x2x32xf32> to vector<8x2x32xf32>
    %32 = vector.extract_strided_slice %28 {offsets = [2, 0, 0], sizes = [8, 2, 32], strides = [1, 1, 1]} : vector<10x2x32xf32> to vector<8x2x32xf32>
    %33 = vector.extract_strided_slice %29 {offsets = [0, 0, 0], sizes = [8, 2, 32], strides = [1, 1, 1]} : vector<10x2x32xf32> to vector<8x2x32xf32>
    %34 = vector.extract_strided_slice %29 {offsets = [1, 0, 0], sizes = [8, 2, 32], strides = [1, 1, 1]} : vector<10x2x32xf32> to vector<8x2x32xf32>
    %35 = vector.extract_strided_slice %29 {offsets = [2, 0, 0], sizes = [8, 2, 32], strides = [1, 1, 1]} : vector<10x2x32xf32> to vector<8x2x32xf32>
    %36 = tpu.concatenate %30, %31, %32, %33, %34, %35 in 2 : vector<8x2x32xf32>, vector<8x2x32xf32>, vector<8x2x32xf32>, vector<8x2x32xf32>, vector<8x2x32xf32>, vector<8x2x32xf32> -> vector<8x2x192xf32>
    %37 = vector.shape_cast %36 : vector<8x2x192xf32> to vector<16x192xf32>
    %c0_35 = arith.constant 0 : index
    %c0_36 = arith.constant 0 : index
    %38 = vector.load %arg7[%c0_35, %c0_36] : memref<192x32xf32, #tpu.memory_space<vmem>>, vector<192x32xf32>
    %cst_37 = arith.constant dense<0.000000e+00> : vector<16x32xf32>
    %39 = tpu.matmul %37, %38, %cst_37 {dimension_numbers = #tpu.dot_dimension_numbers<[1], [0], [0], [1], [0, 0, 1, 1], [], []>} : vector<16x192xf32>, vector<192x32xf32>, vector<16x32xf32> -> vector<16x32xf32>
    %c0_38 = arith.constant 0 : index
    %c0_39 = arith.constant 0 : index
    %40 = vector.load %arg8[%c0_38, %c0_39] : memref<1x32xf32, #tpu.memory_space<vmem>>, vector<1x32xf32>
    %41 = vector.broadcast %40 : vector<1x32xf32> to vector<16x32xf32>
    %42 = arith.addf %39, %41 : vector<16x32xf32>
    %cst_40 = arith.constant 0.000000e+00 : f32
    %43 = vector.broadcast %cst_40 : f32 to vector<16x32xf32>
    %44 = arith.maximumf %42, %43 : vector<16x32xf32>
    %45 = vector.shape_cast %44 : vector<16x32xf32> to vector<8x2x32xf32>
    %46 = tpu.iota {dimensions = array<i32: 0>} : vector<8x2x1xi32>
    %47 = vector.shape_cast %22 : vector<2x1xi32> to vector<1x2x1xi32>
    %48 = vector.broadcast %47 : vector<1x2x1xi32> to vector<8x2x1xi32>
    %49 = arith.cmpi slt, %46, %48 : vector<8x2x1xi32>
    %cst_41 = arith.constant -1.000000e+00 : f32
    %50 = vector.shape_cast %49 : vector<8x2x1xi1> to vector<8x2x1xi1>
    %51 = vector.broadcast %50 : vector<8x2x1xi1> to vector<8x2x32xi1>
    %52 = vector.broadcast %cst_41 : f32 to vector<8x2x32xf32>
    %53 = arith.select %51, %45, %52 : vector<8x2x32xi1>, vector<8x2x32xf32>
    %cst_42 = arith.constant dense<0xFF800000> : vector<2x32xf32>
    %54 = vector.multi_reduction <maximumf>, %53, %cst_42 [0] : vector<8x2x32xf32> to vector<2x32xf32>
    %c0_43 = arith.constant 0 : index
    %c0_44 = arith.constant 0 : index
    %55 = vector.load %arg9[%c0_43, %c0_44] : memref<32x128xf32, #tpu.memory_space<vmem>>, vector<32x128xf32>
    %cst_45 = arith.constant dense<0.000000e+00> : vector<2x128xf32>
    %56 = tpu.matmul %54, %55, %cst_45 {dimension_numbers = #tpu.dot_dimension_numbers<[1], [0], [0], [1], [0, 0, 1, 1], [], []>} : vector<2x32xf32>, vector<32x128xf32>, vector<2x128xf32> -> vector<2x128xf32>
    %c0_46 = arith.constant 0 : index
    %c0_47 = arith.constant 0 : index
    %57 = vector.load %arg10[%c0_46, %c0_47] : memref<1x128xf32, #tpu.memory_space<vmem>>, vector<1x128xf32>
    %58 = vector.broadcast %57 : vector<1x128xf32> to vector<2x128xf32>
    %59 = arith.addf %56, %58 : vector<2x128xf32>
    %c0_48 = arith.constant 0 : index
    %c0_49 = arith.constant 0 : index
    %60 = vector.load %arg11[%c0_48, %c0_49] : memref<2x128xf32, #tpu.memory_space<vmem>>, vector<2x128xf32>
    tpu.vector_store %arg11[%c0_48, %c0_49], %59 {strides = array<i32>} : memref<2x128xf32, #tpu.memory_space<vmem>>, vector<2x128xf32>,
    return
  }
  func.func @transform_0(%arg0: i32) -> (i32, i32, i32) {
    %c0_i32 = arith.constant 0 : i32
    %c0_i32_0 = arith.constant 0 : i32
    %c0_i32_1 = arith.constant 0 : i32
    return %c0_i32, %arg0, %c0_i32_0 : i32, i32, i32
  }
  func.func @transform_1(%arg0: i32) -> (i32, i32) {
    %c0_i32 = arith.constant 0 : i32
    %c0_i32_0 = arith.constant 0 : i32
    return %arg0, %c0_i32 : i32, i32
  }
  func.func @transform_2(%arg0: i32) -> (i32, i32) {
    %c0_i32 = arith.constant 0 : i32
    %c0_i32_0 = arith.constant 0 : i32
    %c0_i32_1 = arith.constant 0 : i32
    return %c0_i32, %c0_i32_0 : i32, i32
  }
  func.func @transform_3(%arg0: i32) -> (i32, i32) {
    %c0_i32 = arith.constant 0 : i32
    %c0_i32_0 = arith.constant 0 : i32
    %c0_i32_1 = arith.constant 0 : i32
    return %c0_i32, %c0_i32_0 : i32, i32
  }
  func.func @transform_4(%arg0: i32) -> (i32, i32) {
    %c0_i32 = arith.constant 0 : i32
    %c0_i32_0 = arith.constant 0 : i32
    %c0_i32_1 = arith.constant 0 : i32
    return %c0_i32, %c0_i32_0 : i32, i32
  }
  func.func @transform_5(%arg0: i32) -> (i32, i32) {
    %c0_i32 = arith.constant 0 : i32
    %c0_i32_0 = arith.constant 0 : i32
    %c0_i32_1 = arith.constant 0 : i32
    return %c0_i32, %c0_i32_0 : i32, i32
  }
  func.func @transform_6(%arg0: i32) -> (i32, i32) {
    %c0_i32 = arith.constant 0 : i32
    %c0_i32_0 = arith.constant 0 : i32
    %c0_i32_1 = arith.constant 0 : i32
    return %c0_i32, %c0_i32_0 : i32, i32
  }
  func.func @transform_7(%arg0: i32) -> (i32, i32) {
    %c0_i32 = arith.constant 0 : i32
    %c0_i32_0 = arith.constant 0 : i32
    %c0_i32_1 = arith.constant 0 : i32
    return %c0_i32, %c0_i32_0 : i32, i32
  }
  func.func @transform_8(%arg0: i32) -> (i32, i32) {
    %c0_i32 = arith.constant 0 : i32
    %c0_i32_0 = arith.constant 0 : i32
    %c0_i32_1 = arith.constant 0 : i32
    return %c0_i32, %c0_i32_0 : i32, i32
  }
  func.func @transform_9(%arg0: i32) -> (i32, i32) {
    %c0_i32 = arith.constant 0 : i32
    %c0_i32_0 = arith.constant 0 : i32
    %c0_i32_1 = arith.constant 0 : i32
    return %c0_i32, %c0_i32_0 : i32, i32
  }
  func.func @transform_10(%arg0: i32) -> (i32, i32) {
    %c0_i32 = arith.constant 0 : i32
    %c0_i32_0 = arith.constant 0 : i32
    return %arg0, %c0_i32 : i32, i32
  }
}

</mosaic_0001>

<llo_original>
// kernel: tpu_custom_call.1
$region0: #{tpu_custom_call.1}
  #allocation0 [shape = 'u32[]', space=smem, size = 0x4, offset = 0x4, fixed_abs, tag = 'smem constant byte address 0x4 - core index']
  #allocation1 [shape = 'u32[144,128]{1,0:T(1,128)}', space=vmem, size = 0x12000, scoped, tag = 'internal scratch']
  #allocation2 [shape = 'f32[8,2,256]{2,1,0:T(2,128)}', space=vmem, size = 0x4000, scoped, tag = 'scratch operand']
  #allocation3 [shape = 'f32[10,2,32]{2,1,0:T(2,128)}', space=vmem, size = 0x2800, scoped, tag = 'scratch operand']
  #allocation4 [shape = 'f32[10,2,32]{2,1,0:T(2,128)}', space=vmem, size = 0x2800, scoped, tag = 'scratch operand']
  %s0 = inlined_call_operand.vmem [shape: f32[8,2,32], index: 0, kind: input, shape index: {}]
  %s1 = inlined_call_operand.vmem [shape: s32[2,1], index: 1, kind: input, shape index: {}]
  %s2 = inlined_call_operand.vmem [shape: f32[32,256], index: 2, kind: input, shape index: {}]
  %s3 = inlined_call_operand.vmem [shape: f32[1,256], index: 3, kind: input, shape index: {}]
  %s4 = inlined_call_operand.vmem [shape: f32[32,128], index: 4, kind: input, shape index: {}]
  %s5 = inlined_call_operand.vmem [shape: f32[32,128], index: 5, kind: input, shape index: {}]
  %s6 = inlined_call_operand.vmem [shape: f32[192,32], index: 6, kind: input, shape index: {}]
  %s7 = inlined_call_operand.vmem [shape: f32[1,32], index: 7, kind: input, shape index: {}]
  %s8 = inlined_call_operand.vmem [shape: f32[32,128], index: 8, kind: input, shape index: {}]
  %s9 = inlined_call_operand.vmem [shape: f32[1,128], index: 9, kind: input, shape index: {}]
  %s10 = inlined_call_operand.hbm [shape: f32[2,128], index: 10, kind: output, shape index: {}]
  %s11 = sld [smem:[#allocation0]]
  $region57: #{tpu_custom_call.1} parent=0
    _
  %s13 = ssub.s32 1, %s11
  %s14 = scalar_select 0, %s13, %s11
  $region1: #{tpu_custom_call.1} parent=0
    #allocation5 [shape = 'u8[1024]{0}', space=vmem, size = 0x400, scoped, tag = 'output window, operand 0, single buffered']
    #allocation6 [shape = 's32[1]{0}', space=sflag, size = 0x4, scoped, tag = 'scoped memory for tpu_custom_call.1']
    %15 = vsyncpa [#allocation6], 0
    // Predicated region
    $region2: #{tpu_custom_call.1} parent=1 // pred_check
      _
    $region3: #{tpu_custom_call.1} parent=1 // pred_check_branch
      %17 = sbr.rel (0) target = $region5
    $region4: #{tpu_custom_call.1} parent=1 // pred_region
      _
    $region5: #{tpu_custom_call.1} parent=1 // pred_fallthru
      _
    // Predicated region
    $region6: #{tpu_custom_call.1} parent=1 // pred_check
      _
    $region7: #{tpu_custom_call.1} parent=1 // pred_check_branch
      %19 = sbr.rel (0) target = $region9
    $region8: #{tpu_custom_call.1} parent=1 // pred_region
      _
    $region9: #{tpu_custom_call.1} parent=1 // pred_fallthru
      _
    // Predicated region
    $region10: #{tpu_custom_call.1} parent=1 // pred_check
      _
    $region11: #{tpu_custom_call.1} parent=1 // pred_check_branch
      %21 = sbr.rel (0) target = $region13
    $region12: #{tpu_custom_call.1} parent=1 // pred_region
      _
    $region13: #{tpu_custom_call.1} parent=1 // pred_fallthru
      _
    // Predicated region
    $region14: #{tpu_custom_call.1} parent=1 // pred_check
      _
    $region15: #{tpu_custom_call.1} parent=1 // pred_check_branch
      %23 = sbr.rel (0) target = $region17
    $region16: #{tpu_custom_call.1} parent=1 // pred_region
      _
    $region17: #{tpu_custom_call.1} parent=1 // pred_fallthru
      _
    // Predicated region
    $region18: #{tpu_custom_call.1} parent=1 // pred_check
      _
    $region19: #{tpu_custom_call.1} parent=1 // pred_check_branch
      %25 = sbr.rel (0) target = $region21
    $region20: #{tpu_custom_call.1} parent=1 // pred_region
      _
    $region21: #{tpu_custom_call.1} parent=1 // pred_fallthru
      _
    // Predicated region
    $region22: #{tpu_custom_call.1} parent=1 // pred_check
      _
    $region23: #{tpu_custom_call.1} parent=1 // pred_check_branch
      %27 = sbr.rel (0) target = $region25
    $region24: #{tpu_custom_call.1} parent=1 // pred_region
      _
    $region25: #{tpu_custom_call.1} parent=1 // pred_fallthru
      _
    // Predicated region
    $region26: #{tpu_custom_call.1} parent=1 // pred_check
      _
    $region27: #{tpu_custom_call.1} parent=1 // pred_check_branch
      %29 = sbr.rel (0) target = $region29
    $region28: #{tpu_custom_call.1} parent=1 // pred_region
      _
    $region29: #{tpu_custom_call.1} parent=1 // pred_fallthru
      _
    // Predicated region
    $region30: #{tpu_custom_call.1} parent=1 // pred_check
      _
    $region31: #{tpu_custom_call.1} parent=1 // pred_check_branch
      %31 = sbr.rel (0) target = $region33
    $region32: #{tpu_custom_call.1} parent=1 // pred_region
      _
    $region33: #{tpu_custom_call.1} parent=1 // pred_fallthru
      _
    // Predicated region
    $region34: #{tpu_custom_call.1} parent=1 // pred_check
      _
    $region35: #{tpu_custom_call.1} parent=1 // pred_check_branch
      %33 = sbr.rel (0) target = $region37
    $region36: #{tpu_custom_call.1} parent=1 // pred_region
      _
    $region37: #{tpu_custom_call.1} parent=1 // pred_fallthru
      _
    // Predicated region
    $region38: #{tpu_custom_call.1} parent=1 // pred_check
      _
    $region39: #{tpu_custom_call.1} parent=1 // pred_check_branch
      %35 = sbr.rel (0) target = $region41
    $region40: #{tpu_custom_call.1} parent=1 // pred_region
      _
    $region41: #{tpu_custom_call.1} parent=1 // pred_fallthru
      _
    %v36 = vld [vmem:[%s0] sm:$0x3]
    %v37 = vld [vmem:[%s0 + $0x2] sm:$0x3]
    %v38 = vld [vmem:[%s0 + $0x4] sm:$0x3]
    %v39 = vld [vmem:[%s0 + $0x6] sm:$0x3]
    %v40 = vld [vmem:[%s0 + $0x8] sm:$0x3]
    %v41 = vld [vmem:[%s0 + $0xa] sm:$0x3]
    %v42 = vld [vmem:[%s0 + $0xc] sm:$0x3]
    %v43 = vld [vmem:[%s0 + $0xe] sm:$0x3]
    %v44 = vld [vmem:[%s2] sm:$0xff]
    %v45 = vld [vmem:[%s2 + $0x8] sm:$0xff]
    %v46 = vld [vmem:[%s2 + $0x10] sm:$0xff]
    %v47 = vld [vmem:[%s2 + $0x18] sm:$0xff]
    %v48 = vld [vmem:[%s2 + $0x20] sm:$0xff]
    %v49 = vld [vmem:[%s2 + $0x28] sm:$0xff]
    %v50 = vld [vmem:[%s2 + $0x30] sm:$0xff]
    %v51 = vld [vmem:[%s2 + $0x38] sm:$0xff]
    %v52 = vld [vmem:[%s3] sm:$0x3]
    %v54 = vlaneseq
    %v55 = vshrl.u32 %v54, 7
    %v56 = vsub.s32 0, %v55
    %v57 = vrot.slane %v52, %v56
    %v58 = vlaneseq
    %v59 = vshrl.u32 %v58, 7
    %v60 = vsub.s32 1, %v59
    %v61 = vrot.slane %v52, %v60
    %v72 = vcombine.low %v36, %v37
    %v73 = vcombine.low %v38, %v39
    %v75 = vunpack.c.l.s4 1983009808
    %v76 = vunpack.c.0.s8 %v75
    %v77 = vlaneseq
    %v78 = vshrl.u32 %v77, 7
    %v79 = vsub.s32 %v76, %v78
    %v80 = vrot.slane %v72, %v79
    %v82 = vunpack.c.l.s4 1983009808
    %v83 = vunpack.c.0.s8 %v82
    %v84 = vlaneseq
    %v85 = vshrl.u32 %v84, 7
    %v86 = vsub.s32 %v83, %v85
    %v87 = vrot.slane %v73, %v86
    %v88 = vcombine.low %v80, %v87
    %v89 = vcombine.low %v40, %v41
    %v90 = vcombine.low %v42, %v43
    %v92 = vunpack.c.l.s4 1983009808
    %v93 = vunpack.c.0.s8 %v92
    %v94 = vlaneseq
    %v95 = vshrl.u32 %v94, 7
    %v96 = vsub.s32 %v93, %v95
    %v97 = vrot.slane %v89, %v96
    %v99 = vunpack.c.l.s4 1983009808
    %v100 = vunpack.c.0.s8 %v99
    %v101 = vlaneseq
    %v102 = vshrl.u32 %v101, 7
    %v103 = vsub.s32 %v100, %v102
    %v104 = vrot.slane %v90, %v103
    %v105 = vcombine.low %v97, %v104
    %vm106 = vcmask 261120
    %v107 = vsel %vm106, %v88, 0
    %v109 = vsel %vm106, %v105, 0
    %111 = vmatprep.subr.mxu0 %v45
    %112 = vmatpush1.msra.mxu0 %v44
    %113 = vmatprep.subr.mxu0 %v47
    %114 = vmatpush1.msra.mxu0 %v46
    %115 = vmatprep.subr.mxu0 %v49
    %116 = vmatpush1.msra.mxu0 %v48
    %117 = vmatprep.subr.mxu0 %v51
    %118 = vmatpush1.msra.mxu0 %v50
    %119 = vmatprep.subr.mxu0 0.0
    %120 = vmatpush1.msra.mxu0 0.0
    %121 = vmatprep.subr.mxu0 0.0
    %122 = vmatpush1.msra.mxu0 0.0
    %123 = vmatprep.subr.mxu0 0.0
    %124 = vmatpush1.msra.mxu0 0.0
    %125 = vmatprep.subr.mxu0 0.0
    %126 = vmatpush1.msra.mxu0 0.0
    %127 = vmatprep.subr.mxu0 0.0
    %128 = vmatpush1.msra.mxu0 0.0
    %129 = vmatprep.subr.mxu0 0.0
    %130 = vmatpush1.msra.mxu0 0.0
    %131 = vmatprep.subr.mxu0 0.0
    %132 = vmatpush1.msra.mxu0 0.0
    %133 = vmatprep.subr.mxu0 0.0
    %134 = vmatpush1.msra.mxu0 0.0
    %135 = vmatprep.subr.mxu0 0.0
    %136 = vmatpush1.msra.mxu0 0.0
    %137 = vmatprep.subr.mxu0 0.0
    %138 = vmatpush1.msra.mxu0 0.0
    %139 = vmatprep.subr.mxu0 0.0
    %140 = vmatpush1.msra.mxu0 0.0
    %141 = vmatprep.subr.mxu0 0.0
    %142 = vmatpush1.msra.mxu0 0.0
    %143 = vmatprep.subr.mxu0 0.0
    %144 = vmatpush1.msra.mxu0 0.0
    %145 = vmatprep.subr.mxu0 0.0
    %146 = vmatpush1.msra.mxu0 0.0
    %147 = vmatprep.subr.mxu0 0.0
    %148 = vmatpush1.msra.mxu0 0.0
    %149 = vmatprep.subr.mxu0 0.0
    %150 = vmatpush1.msra.mxu0 0.0
    %151 = vmatprep.subr.mxu0 0.0
    %152 = vmatpush1.msra.mxu0 0.0
    %153 = vmatprep.subr.mxu0 0.0
    %154 = vmatpush1.msra.mxu0 0.0
    %155 = vmatprep.subr.mxu0 0.0
    %156 = vmatpush1.msra.mxu0 0.0
    %157 = vmatprep.subr.mxu0 0.0
    %158 = vmatpush1.msra.mxu0 0.0
    %159 = vmatprep.subr.mxu0 0.0
    %160 = vmatpush1.msra.mxu0 0.0
    %161 = vmatprep.subr.mxu0 0.0
    %162 = vmatpush1.msra.mxu0 0.0
    %163 = vmatprep.subr.mxu0 0.0
    %164 = vmatpush1.msra.mxu0 0.0
    %165 = vmatprep.subr.mxu0 0.0
    %166 = vmatpush1.msra.mxu0 0.0
    %167 = vmatprep.subr.mxu0 0.0
    %168 = vmatpush1.msra.mxu0 0.0
    %169 = vmatprep.subr.mxu0 0.0
    %170 = vmatpush1.msra.mxu0 0.0
    %171 = vmatprep.subr.mxu0 0.0
    %172 = vmatpush1.msra.mxu0 0.0
    %173 = vmatprep.subr.mxu0 0.0
    %174 = vmatpush1.msra.mxu0 0.0
    %175 = vmatprep.mubr.f32.mxu0 0.0
    %176 = vmatmul.mubr.f32.gmra.mrb[0].mxu0 %v107
    %v177 = vpop.f32.mrb[0].mxu0
    %v178 = vadd.f32 %v57, %v177
    %v179 = vpop.f32.mrb[0].mxu0
    %v180 = vadd.f32 %v61, %v179
    %181 = vmatprep.mubr.f32.mxu0 0.0
    %182 = vmatmul.mubr.f32.gmra.mrb[0].mxu0 %v109
    %v183 = vpop.f32.mrb[0].mxu0
    %v184 = vadd.f32 %v57, %v183
    %v185 = vpop.f32.mrb[0].mxu0
    %v186 = vadd.f32 %v61, %v185
    %187 = vdwg.mxu0
    %v192 = vcombine.low %v178, %v180
    %v193 = vcombine.high %v178, %v180
    %v195 = vunpack.c.l.s4 1983009808
    %v196 = vunpack.c.0.s8 %v195
    %v197 = vlaneseq
    %v198 = vshrl.u32 %v197, 7
    %v199 = vsub.s32 %v196, %v198
    %v200 = vrot.slane %v192, %v199
    %v202 = vunpack.c.l.s4 1983009808
    %v203 = vunpack.c.0.s8 %v202
    %v204 = vlaneseq
    %v205 = vshrl.u32 %v204, 7
    %v206 = vsub.s32 %v203, %v205
    %v207 = vrot.slane %v193, %v206
    %v208 = vcombine.high %v200, %v200
    %v209 = vcombine.high %v207, %v207
    %v210 = vcombine.low %v184, %v186
    %v211 = vcombine.high %v184, %v186
    %v213 = vunpack.c.l.s4 1983009808
    %v214 = vunpack.c.0.s8 %v213
    %v215 = vlaneseq
    %v216 = vshrl.u32 %v215, 7
    %v217 = vsub.s32 %v214, %v216
    %v218 = vrot.slane %v210, %v217
    %v220 = vunpack.c.l.s4 1983009808
    %v221 = vunpack.c.0.s8 %v220
    %v222 = vlaneseq
    %v223 = vshrl.u32 %v222, 7
    %v224 = vsub.s32 %v221, %v223
    %v225 = vrot.slane %v211, %v224
    %v226 = vcombine.high %v218, %v218
    %v227 = vcombine.high %v225, %v225
    %236 = vst [vmem:[#allocation2] sm:$0xf] %v200
    %237 = vst [vmem:[#allocation2 + $0x4] sm:$0xf] %v208
    %238 = vst [vmem:[#allocation2 + $0x8] sm:$0xf] %v207
    %239 = vst [vmem:[#allocation2 + $0xc] sm:$0xf] %v209
    %240 = vst [vmem:[#allocation2 + $0x10] sm:$0xf] %v218
    %241 = vst [vmem:[#allocation2 + $0x14] sm:$0xf] %v226
    %242 = vst [vmem:[#allocation2 + $0x18] sm:$0xf] %v225
    %243 = vst [vmem:[#allocation2 + $0x1c] sm:$0xf] %v227
    %vm244 = vcmask 254976
    %245 = vst.msk [vmem:[#allocation3] sm:$0x3] %vm244, 0.0
    %s246 = scalar_lea.vmem [#allocation3], 18
    %247 = vst.msk [vmem:[%s246] sm:$0x3] %vm244, 0.0
    %248 = vst.msk [vmem:[#allocation4] sm:$0x3] %vm244, 0.0
    %s249 = scalar_lea.vmem [#allocation4], 18
    %250 = vst.msk [vmem:[%s249] sm:$0x3] %vm244, 0.0
    %v251 = vld [vmem:[%s1] sm:$0x3]
    %v252 = vld [vmem:[%s4] sm:$0xff]
    %v253 = vld [vmem:[%s4 + $0x8] sm:$0xff]
    %v254 = vld [vmem:[%s4 + $0x10] sm:$0xff]
    %v255 = vld [vmem:[%s4 + $0x18] sm:$0xff]
    %v256 = vld [vmem:[%s5] sm:$0xff]
    %v257 = vld [vmem:[%s5 + $0x8] sm:$0xff]
    %v258 = vld [vmem:[%s5 + $0x10] sm:$0xff]
    %v259 = vld [vmem:[%s5 + $0x18] sm:$0xff]
    loop: start=0, step=1, limit=8
    $region42: #{tpu_custom_call.1} parent=1 // loop_pre_header
      _
    $region43: #{tpu_custom_call.1} parent=1 // loop_header
      %s261 = sphi 0, %s265
      %p262 = scmp.ge.s32.totalorder %s261, 8
      %v266 = vphi 0.0, %v557
      %v267 = vphi 0.0, %v571
      %v268 = vphi 0.0, %v579
      %v269 = vphi 0.0, %v593
    $region44: #{tpu_custom_call.1} parent=1 // loop_header_branch
      %264 = sbr.rel (%p262) target = $region48
    $region45: #{tpu_custom_call.1} parent=1 // loop_body
      %s270 = ssub.s32 7, %s261
      %v271 = vstv %s261
      %vm272 = vcmp.lt.s32.totalorder %v271, %v251
      %v273 = vsel %vm272, 1, 0
      %v274 = vcvt.s32.f32 %v273
      %v275 = vstv %s270
      %vm276 = vcmp.lt.s32.totalorder %v275, %v251
      %v277 = vsel %vm276, 1, 0
      %v278 = vcvt.s32.f32 %v277
      %s279 = smul.u32 %s261, 2
      %s280 = smul.addr %s279, 2
      %s281 = scalar_lea.vmem [#allocation2], %s280
      %v282 = vld [vmem:[%s281] sm:$0xf]
      %v284 = vsel %vm106, %v266, 0
      %286 = vmatprep.subr.mxu0 0.0
      %287 = vmatpush1.msra.mxu0 %v252
      %288 = vmatprep.subr.mxu0 0.0
      %289 = vmatpush1.msra.mxu0 %v253
      %290 = vmatprep.subr.mxu0 0.0
      %291 = vmatpush1.msra.mxu0 %v254
      %292 = vmatprep.subr.mxu0 0.0
      %293 = vmatpush1.msra.mxu0 %v255
      %294 = vmatprep.subr.mxu0 0.0
      %295 = vmatpush1.msra.mxu0 0.0
      %296 = vmatprep.subr.mxu0 0.0
      %297 = vmatpush1.msra.mxu0 0.0
      %298 = vmatprep.subr.mxu0 0.0
      %299 = vmatpush1.msra.mxu0 0.0
      %300 = vmatprep.subr.mxu0 0.0
      %301 = vmatpush1.msra.mxu0 0.0
      %302 = vmatprep.subr.mxu0 0.0
      %303 = vmatpush1.msra.mxu0 0.0
      %304 = vmatprep.subr.mxu0 0.0
      %305 = vmatpush1.msra.mxu0 0.0
      %306 = vmatprep.subr.mxu0 0.0
      %307 = vmatpush1.msra.mxu0 0.0
      %308 = vmatprep.subr.mxu0 0.0
      %309 = vmatpush1.msra.mxu0 0.0
      %310 = vmatprep.subr.mxu0 0.0
      %311 = vmatpush1.msra.mxu0 0.0
      %312 = vmatprep.subr.mxu0 0.0
      %313 = vmatpush1.msra.mxu0 0.0
      %314 = vmatprep.subr.mxu0 0.0
      %315 = vmatpush1.msra.mxu0 0.0
      %316 = vmatprep.subr.mxu0 0.0
      %317 = vmatpush1.msra.mxu0 0.0
      %318 = vmatprep.subr.mxu0 0.0
      %319 = vmatpush1.msra.mxu0 0.0
      %320 = vmatprep.subr.mxu0 0.0
      %321 = vmatpush1.msra.mxu0 0.0
      %322 = vmatprep.subr.mxu0 0.0
      %323 = vmatpush1.msra.mxu0 0.0
      %324 = vmatprep.subr.mxu0 0.0
      %325 = vmatpush1.msra.mxu0 0.0
      %326 = vmatprep.subr.mxu0 0.0
      %327 = vmatpush1.msra.mxu0 0.0
      %328 = vmatprep.subr.mxu0 0.0
      %329 = vmatpush1.msra.mxu0 0.0
      %330 = vmatprep.subr.mxu0 0.0
      %331 = vmatpush1.msra.mxu0 0.0
      %332 = vmatprep.subr.mxu0 0.0
      %333 = vmatpush1.msra.mxu0 0.0
      %334 = vmatprep.subr.mxu0 0.0
      %335 = vmatpush1.msra.mxu0 0.0
      %336 = vmatprep.subr.mxu0 0.0
      %337 = vmatpush1.msra.mxu0 0.0
      %338 = vmatprep.subr.mxu0 0.0
      %339 = vmatpush1.msra.mxu0 0.0
      %340 = vmatprep.subr.mxu0 0.0
      %341 = vmatpush1.msra.mxu0 0.0
      %342 = vmatprep.subr.mxu0 0.0
      %343 = vmatpush1.msra.mxu0 0.0
      %344 = vmatprep.subr.mxu0 0.0
      %345 = vmatpush1.msra.mxu0 0.0
      %346 = vmatprep.subr.mxu0 0.0
      %347 = vmatpush1.msra.mxu0 0.0
      %348 = vmatprep.subr.mxu0 0.0
      %349 = vmatpush1.msra.mxu0 0.0
      %350 = vmatprep.mubr.f32.mxu0 0.0
      %351 = vmatmul.mubr.f32.gmra.mrb[0].mxu0 %v284
      %v352 = vpop.f32.mrb[0].mxu0
      %v353 = vadd.f32 0.0, %v352
      %v354 = vpop.f32.mrb[0].mxu0
      %355 = vdwg.mxu0
      %v356 = vadd.f32 %v282, %v353
      %s357 = smul.u32 %s270, 2
      %s358 = smul.addr %s357, 2
      %s359 = scalar_lea.vmem [#allocation2], %s358
      %v360 = vld [vmem:[%s359] sm:$0xf]
      %v362 = vsel %vm106, %v268, 0
      %364 = vmatprep.subr.mxu0 0.0
      %365 = vmatpush1.msra.mxu0 %v256
      %366 = vmatprep.subr.mxu0 0.0
      %367 = vmatpush1.msra.mxu0 %v257
      %368 = vmatprep.subr.mxu0 0.0
      %369 = vmatpush1.msra.mxu0 %v258
      %370 = vmatprep.subr.mxu0 0.0
      %371 = vmatpush1.msra.mxu0 %v259
      %372 = vmatprep.subr.mxu0 0.0
      %373 = vmatpush1.msra.mxu0 0.0
      %374 = vmatprep.subr.mxu0 0.0
      %375 = vmatpush1.msra.mxu0 0.0
      %376 = vmatprep.subr.mxu0 0.0
      %377 = vmatpush1.msra.mxu0 0.0
      %378 = vmatprep.subr.mxu0 0.0
      %379 = vmatpush1.msra.mxu0 0.0
      %380 = vmatprep.subr.mxu0 0.0
      %381 = vmatpush1.msra.mxu0 0.0
      %382 = vmatprep.subr.mxu0 0.0
      %383 = vmatpush1.msra.mxu0 0.0
      %384 = vmatprep.subr.mxu0 0.0
      %385 = vmatpush1.msra.mxu0 0.0
      %386 = vmatprep.subr.mxu0 0.0
      %387 = vmatpush1.msra.mxu0 0.0
      %388 = vmatprep.subr.mxu0 0.0
      %389 = vmatpush1.msra.mxu0 0.0
      %390 = vmatprep.subr.mxu0 0.0
      %391 = vmatpush1.msra.mxu0 0.0
      %392 = vmatprep.subr.mxu0 0.0
      %393 = vmatpush1.msra.mxu0 0.0
      %394 = vmatprep.subr.mxu0 0.0
      %395 = vmatpush1.msra.mxu0 0.0
      %396 = vmatprep.subr.mxu0 0.0
      %397 = vmatpush1.msra.mxu0 0.0
      %398 = vmatprep.subr.mxu0 0.0
      %399 = vmatpush1.msra.mxu0 0.0
      %400 = vmatprep.subr.mxu0 0.0
      %401 = vmatpush1.msra.mxu0 0.0
      %402 = vmatprep.subr.mxu0 0.0
      %403 = vmatpush1.msra.mxu0 0.0
      %404 = vmatprep.subr.mxu0 0.0
      %405 = vmatpush1.msra.mxu0 0.0
      %406 = vmatprep.subr.mxu0 0.0
      %407 = vmatpush1.msra.mxu0 0.0
      %408 = vmatprep.subr.mxu0 0.0
      %409 = vmatpush1.msra.mxu0 0.0
      %410 = vmatprep.subr.mxu0 0.0
      %411 = vmatpush1.msra.mxu0 0.0
      %412 = vmatprep.subr.mxu0 0.0
      %413 = vmatpush1.msra.mxu0 0.0
      %414 = vmatprep.subr.mxu0 0.0
      %415 = vmatpush1.msra.mxu0 0.0
      %416 = vmatprep.subr.mxu0 0.0
      %417 = vmatpush1.msra.mxu0 0.0
      %418 = vmatprep.subr.mxu0 0.0
      %419 = vmatpush1.msra.mxu0 0.0
      %420 = vmatprep.subr.mxu0 0.0
      %421 = vmatpush1.msra.mxu0 0.0
      %422 = vmatprep.subr.mxu0 0.0
      %423 = vmatpush1.msra.mxu0 0.0
      %424 = vmatprep.subr.mxu0 0.0
      %425 = vmatpush1.msra.mxu0 0.0
      %426 = vmatprep.subr.mxu0 0.0
      %427 = vmatpush1.msra.mxu0 0.0
      %428 = vmatprep.mubr.f32.mxu0 0.0
      %429 = vmatmul.mubr.f32.gmra.mrb[0].mxu0 %v362
      %v430 = vpop.f32.mrb[0].mxu0
      %v431 = vadd.f32 0.0, %v430
      %v432 = vpop.f32.mrb[0].mxu0
      %433 = vdwg.mxu0
      %v435 = vrot.slane %v360, 2
      %v437 = vadd.f32 %v435, %v431
      %v438 = vxor.u32 %v356, 2147483648
      %v439 = vmul.f32 %v438, 1.442695
      %v440 = vpow.pop %v439
      %v441 = vadd.f32 %v440, 1.0
      %v442 = vrcp.pop %v441
      %v443 = vmul.f32 1.0, %v442
      %v444 = vtanh.pop %v356
      %v447 = vunpack.c.l.s4 1983009808
      %v448 = vunpack.c.0.s8 %v447
      %v449 = vlaneseq
      %v450 = vshrl.u32 %v449, 7
      %v451 = vsub.s32 %v448, %v450
      %v452 = vrot.slane %v267, %v451
      %453 = vrot.lane.b32.xlu0 %v452, 32
      %v454 = vpop.permute.xlu0 %453
      %v456 = vmul.f32 %v443, %v454
      %458 = vrot.lane.b32.xlu0 %v444, 64
      %v459 = vpop.permute.xlu0 %458
      %v461 = vmul.f32 %v443, %v459
      %463 = vrot.lane.b32.xlu0 %v461, 32
      %v464 = vpop.permute.xlu0 %463
      %v466 = vadd.f32 %v456, %v464
      %v467 = vtanh.pop %v466
      %469 = vrot.lane.b32.xlu0 %v467, 64
      %v470 = vpop.permute.xlu0 %469
      %v472 = vmul.f32 %v443, %v470
      %v473 = vxor.u32 %v437, 2147483648
      %v474 = vmul.f32 %v473, 1.442695
      %v475 = vpow.pop %v474
      %v476 = vadd.f32 %v475, 1.0
      %v477 = vrcp.pop %v476
      %v478 = vmul.f32 1.0, %v477
      %v479 = vtanh.pop %v437
      %v482 = vunpack.c.l.s4 1983009808
      %v483 = vunpack.c.0.s8 %v482
      %v484 = vlaneseq
      %v485 = vshrl.u32 %v484, 7
      %v486 = vsub.s32 %v483, %v485
      %v487 = vrot.slane %v269, %v486
      %488 = vrot.lane.b32.xlu0 %v487, 32
      %v489 = vpop.permute.xlu0 %488
      %v491 = vmul.f32 %v478, %v489
      %493 = vrot.lane.b32.xlu0 %v479, 64
      %v494 = vpop.permute.xlu0 %493
      %v496 = vmul.f32 %v478, %v494
      %498 = vrot.lane.b32.xlu0 %v496, 32
      %v499 = vpop.permute.xlu0 %498
      %v501 = vadd.f32 %v491, %v499
      %v502 = vtanh.pop %v501
      %504 = vrot.lane.b32.xlu0 %v502, 64
      %v505 = vpop.permute.xlu0 %504
      %v507 = vmul.f32 %v478, %v505
      %509 = vset.pattern.permute.xlu0 0
      %510 = vperm.xlu0 %509, %v274
      %v511 = vpop.permute.xlu0 %510
      %v515 = vunpack.c.l.s4 1983009808
      %v516 = vunpack.c.0.s8 %v515
      %v517 = vlaneseq
      %v518 = vshrl.u32 %v517, 7
      %v519 = vsub.s32 %v516, %v518
      %v520 = vrot.slane %v472, %v519
      %521 = vrot.lane.b32.xlu0 %v520, 32
      %v522 = vpop.permute.xlu0 %521
      %v524 = vmul.f32 %v511, %v522
      %s525 = sadd.s32 %s261, 1
      %s526 = smul.u32 %s525, 2
      %s527 = scalar_lea.vmem [#allocation3], %s526
      %528 = vst.msk [vmem:[%s527] sm:$0x3] %vm244, %v524
      %530 = vset.pattern.permute.xlu0 0
      %531 = vperm.xlu0 %530, %v278
      %v532 = vpop.permute.xlu0 %531
      %v536 = vunpack.c.l.s4 1983009808
      %v537 = vunpack.c.0.s8 %v536
      %v538 = vlaneseq
      %v539 = vshrl.u32 %v538, 7
      %v540 = vsub.s32 %v537, %v539
      %v541 = vrot.slane %v507, %v540
      %542 = vrot.lane.b32.xlu0 %v541, 32
      %v543 = vpop.permute.xlu0 %542
      %v545 = vmul.f32 %v532, %v543
      %s546 = ssub.s32 8, %s261
      %s547 = smul.u32 %s546, 2
      %s548 = scalar_lea.vmem [#allocation4], %s547
      %549 = vst.msk [vmem:[%s548] sm:$0x3] %vm244, %v545
      %v550 = vsub.f32 1.0, %v274
      %552 = vset.pattern.permute.xlu0 0
      %553 = vperm.xlu0 %552, %v550
      %v554 = vpop.permute.xlu0 %553
      %v556 = vmul.f32 %v554, %v266
      %v557 = vadd.f32 %v524, %v556
      %v560 = vunpack.c.l.s4 1983009808
      %v561 = vunpack.c.0.s8 %v560
      %v562 = vlaneseq
      %v563 = vshrl.u32 %v562, 7
      %v564 = vsub.s32 %v561, %v563
      %v565 = vrot.slane %v466, %v564
      %566 = vrot.lane.b32.xlu0 %v565, 96
      %v567 = vpop.permute.xlu0 %566
      %v569 = vmul.f32 %v511, %v567
      %v570 = vmul.f32 %v554, %v267
      %v571 = vadd.f32 %v569, %v570
      %v572 = vsub.f32 1.0, %v278
      %574 = vset.pattern.permute.xlu0 0
      %575 = vperm.xlu0 %574, %v572
      %v576 = vpop.permute.xlu0 %575
      %v578 = vmul.f32 %v576, %v268
      %v579 = vadd.f32 %v545, %v578
      %v582 = vunpack.c.l.s4 1983009808
      %v583 = vunpack.c.0.s8 %v582
      %v584 = vlaneseq
      %v585 = vshrl.u32 %v584, 7
      %v586 = vsub.s32 %v583, %v585
      %v587 = vrot.slane %v501, %v586
      %588 = vrot.lane.b32.xlu0 %v587, 96
      %v589 = vpop.permute.xlu0 %588
      %v591 = vmul.f32 %v532, %v589
      %v592 = vmul.f32 %v576, %v269
      %v593 = vadd.f32 %v591, %v592
    $region46: #{tpu_custom_call.1} parent=1 // loop_footer
      %s265 = sadd.s32 1, %s261
    $region47: #{tpu_custom_call.1} parent=1 // loop_footer_branch
      %260 = sbr.rel target = $region43
    $region48: #{tpu_custom_call.1} parent=1 // loop_exit
      _
    %v594 = vld [vmem:[#allocation3] sm:$0x3]
    %v595 = vld [vmem:[#allocation3 + $0x2] sm:$0x3]
    %v596 = vld [vmem:[#allocation3 + $0x4] sm:$0x3]
    %v597 = vld [vmem:[#allocation3 + $0x6] sm:$0x3]
    %v598 = vld [vmem:[#allocation3 + $0x8] sm:$0x3]
    %v599 = vld [vmem:[#allocation3 + $0xa] sm:$0x3]
    %v600 = vld [vmem:[#allocation3 + $0xc] sm:$0x3]
    %v601 = vld [vmem:[#allocation3 + $0xe] sm:$0x3]
    %v602 = vld [vmem:[#allocation3 + $0x10] sm:$0x3]
    %v603 = vld [vmem:[#allocation3 + $0x12] sm:$0x3]
    %v604 = vld [vmem:[#allocation4] sm:$0x3]
    %v605 = vld [vmem:[#allocation4 + $0x2] sm:$0x3]
    %v606 = vld [vmem:[#allocation4 + $0x4] sm:$0x3]
    %v607 = vld [vmem:[#allocation4 + $0x6] sm:$0x3]
    %v608 = vld [vmem:[#allocation4 + $0x8] sm:$0x3]
    %v609 = vld [vmem:[#allocation4 + $0xa] sm:$0x3]
    %v610 = vld [vmem:[#allocation4 + $0xc] sm:$0x3]
    %v611 = vld [vmem:[#allocation4 + $0xe] sm:$0x3]
    %v612 = vld [vmem:[#allocation4 + $0x10] sm:$0x3]
    %v613 = vld [vmem:[#allocation4 + $0x12] sm:$0x3]
    %622 = vrot.lane.b32.xlu0 %v595, 32
    %v623 = vpop.permute.xlu0 %622
    %624 = vrot.lane.b32.xlu0 %v596, 32
    %v625 = vpop.permute.xlu0 %624
    %626 = vrot.lane.b32.xlu0 %v597, 32
    %v627 = vpop.permute.xlu0 %626
    %628 = vrot.lane.b32.xlu0 %v598, 32
    %v629 = vpop.permute.xlu0 %628
    %630 = vrot.lane.b32.xlu0 %v599, 32
    %v631 = vpop.permute.xlu0 %630
    %632 = vrot.lane.b32.xlu0 %v600, 32
    %v633 = vpop.permute.xlu0 %632
    %634 = vrot.lane.b32.xlu0 %v601, 32
    %v635 = vpop.permute.xlu0 %634
    %636 = vrot.lane.b32.xlu0 %v602, 32
    %v637 = vpop.permute.xlu0 %636
    %647 = vrot.lane.b32.xlu0 %v596, 64
    %v648 = vpop.permute.xlu0 %647
    %649 = vrot.lane.b32.xlu0 %v597, 64
    %v650 = vpop.permute.xlu0 %649
    %651 = vrot.lane.b32.xlu0 %v598, 64
    %v652 = vpop.permute.xlu0 %651
    %653 = vrot.lane.b32.xlu0 %v599, 64
    %v654 = vpop.permute.xlu0 %653
    %655 = vrot.lane.b32.xlu0 %v600, 64
    %v656 = vpop.permute.xlu0 %655
    %657 = vrot.lane.b32.xlu0 %v601, 64
    %v658 = vpop.permute.xlu0 %657
    %659 = vrot.lane.b32.xlu0 %v602, 64
    %v660 = vpop.permute.xlu0 %659
    %661 = vrot.lane.b32.xlu0 %v603, 64
    %v662 = vpop.permute.xlu0 %661
    %679 = vrot.lane.b32.xlu0 %v604, 96
    %v680 = vpop.permute.xlu0 %679
    %681 = vrot.lane.b32.xlu0 %v605, 96
    %v682 = vpop.permute.xlu0 %681
    %683 = vrot.lane.b32.xlu0 %v606, 96
    %v684 = vpop.permute.xlu0 %683
    %685 = vrot.lane.b32.xlu0 %v607, 96
    %v686 = vpop.permute.xlu0 %685
    %687 = vrot.lane.b32.xlu0 %v608, 96
    %v688 = vpop.permute.xlu0 %687
    %689 = vrot.lane.b32.xlu0 %v609, 96
    %v690 = vpop.permute.xlu0 %689
    %691 = vrot.lane.b32.xlu0 %v610, 96
    %v692 = vpop.permute.xlu0 %691
    %693 = vrot.lane.b32.xlu0 %v611, 96
    %v694 = vpop.permute.xlu0 %693
    %705 = vrot.lane.b32.xlu0 %v606, 32
    %v706 = vpop.permute.xlu0 %705
    %707 = vrot.lane.b32.xlu0 %v607, 32
    %v708 = vpop.permute.xlu0 %707
    %709 = vrot.lane.b32.xlu0 %v608, 32
    %v710 = vpop.permute.xlu0 %709
    %711 = vrot.lane.b32.xlu0 %v609, 32
    %v712 = vpop.permute.xlu0 %711
    %713 = vrot.lane.b32.xlu0 %v610, 32
    %v714 = vpop.permute.xlu0 %713
    %715 = vrot.lane.b32.xlu0 %v611, 32
    %v716 = vpop.permute.xlu0 %715
    %717 = vrot.lane.b32.xlu0 %v612, 32
    %v718 = vpop.permute.xlu0 %717
    %719 = vrot.lane.b32.xlu0 %v613, 32
    %v720 = vpop.permute.xlu0 %719
    %v729 = vsel %vm106, %v594, %v623
    %v730 = vsel %vm106, %v595, %v625
    %v731 = vsel %vm106, %v596, %v627
    %v732 = vsel %vm106, %v597, %v629
    %v733 = vsel %vm106, %v598, %v631
    %v734 = vsel %vm106, %v599, %v633
    %v735 = vsel %vm106, %v600, %v635
    %v736 = vsel %vm106, %v601, %v637
    %vm737 = vcmask 523264
    %v738 = vsel %vm737, %v729, %v648
    %v739 = vsel %vm737, %v730, %v650
    %v740 = vsel %vm737, %v731, %v652
    %v741 = vsel %vm737, %v732, %v654
    %v742 = vsel %vm737, %v733, %v656
    %v743 = vsel %vm737, %v734, %v658
    %v744 = vsel %vm737, %v735, %v660
    %v745 = vsel %vm737, %v736, %v662
    %vm746 = vcmask 785408
    %v747 = vsel %vm746, %v738, %v680
    %v748 = vsel %vm746, %v739, %v682
    %v749 = vsel %vm746, %v740, %v684
    %v750 = vsel %vm746, %v741, %v686
    %v751 = vsel %vm746, %v742, %v688
    %v752 = vsel %vm746, %v743, %v690
    %v753 = vsel %vm746, %v744, %v692
    %v754 = vsel %vm746, %v745, %v694
    %v755 = vsel %vm106, %v605, %v706
    %v756 = vsel %vm106, %v606, %v708
    %v757 = vsel %vm106, %v607, %v710
    %v758 = vsel %vm106, %v608, %v712
    %v759 = vsel %vm106, %v609, %v714
    %v760 = vsel %vm106, %v610, %v716
    %v761 = vsel %vm106, %v611, %v718
    %v762 = vsel %vm106, %v612, %v720
    %v779 = vcombine.low %v747, %v755
    %v781 = vunpack.c.l.s4 1983009808
    %v782 = vunpack.c.0.s8 %v781
    %v783 = vlaneseq
    %v784 = vshrl.u32 %v783, 7
    %v785 = vsub.s32 %v782, %v784
    %v786 = vrot.slane %v779, %v785
    %v787 = vcombine.low %v748, %v756
    %v789 = vunpack.c.l.s4 1983009808
    %v790 = vunpack.c.0.s8 %v789
    %v791 = vlaneseq
    %v792 = vshrl.u32 %v791, 7
    %v793 = vsub.s32 %v790, %v792
    %v794 = vrot.slane %v787, %v793
    %v795 = vcombine.low %v749, %v757
    %v797 = vunpack.c.l.s4 1983009808
    %v798 = vunpack.c.0.s8 %v797
    %v799 = vlaneseq
    %v800 = vshrl.u32 %v799, 7
    %v801 = vsub.s32 %v798, %v800
    %v802 = vrot.slane %v795, %v801
    %v803 = vcombine.low %v750, %v758
    %v805 = vunpack.c.l.s4 1983009808
    %v806 = vunpack.c.0.s8 %v805
    %v807 = vlaneseq
    %v808 = vshrl.u32 %v807, 7
    %v809 = vsub.s32 %v806, %v808
    %v810 = vrot.slane %v803, %v809
    %v811 = vcombine.low %v751, %v759
    %v813 = vunpack.c.l.s4 1983009808
    %v814 = vunpack.c.0.s8 %v813
    %v815 = vlaneseq
    %v816 = vshrl.u32 %v815, 7
    %v817 = vsub.s32 %v814, %v816
    %v818 = vrot.slane %v811, %v817
    %v819 = vcombine.low %v752, %v760
    %v821 = vunpack.c.l.s4 1983009808
    %v822 = vunpack.c.0.s8 %v821
    %v823 = vlaneseq
    %v824 = vshrl.u32 %v823, 7
    %v825 = vsub.s32 %v822, %v824
    %v826 = vrot.slane %v819, %v825
    %v827 = vcombine.low %v753, %v761
    %v829 = vunpack.c.l.s4 1983009808
    %v830 = vunpack.c.0.s8 %v829
    %v831 = vlaneseq
    %v832 = vshrl.u32 %v831, 7
    %v833 = vsub.s32 %v830, %v832
    %v834 = vrot.slane %v827, %v833
    %v835 = vcombine.low %v754, %v762
    %v837 = vunpack.c.l.s4 1983009808
    %v838 = vunpack.c.0.s8 %v837
    %v839 = vlaneseq
    %v840 = vshrl.u32 %v839, 7
    %v841 = vsub.s32 %v838, %v840
    %v842 = vrot.slane %v835, %v841
    %v843 = vld [vmem:[%s6] sm:$0xff]
    %v844 = vld [vmem:[%s6 + $0x8] sm:$0xff]
    %v845 = vld [vmem:[%s6 + $0x10] sm:$0xff]
    %v846 = vld [vmem:[%s6 + $0x18] sm:$0xff]
    %v847 = vld [vmem:[%s6 + $0x20] sm:$0xff]
    %v848 = vld [vmem:[%s6 + $0x28] sm:$0xff]
    %v849 = vld [vmem:[%s6 + $0x30] sm:$0xff]
    %v850 = vld [vmem:[%s6 + $0x38] sm:$0xff]
    %v851 = vld [vmem:[%s6 + $0x40] sm:$0xff]
    %v852 = vld [vmem:[%s6 + $0x48] sm:$0xff]
    %v853 = vld [vmem:[%s6 + $0x50] sm:$0xff]
    %v854 = vld [vmem:[%s6 + $0x58] sm:$0xff]
    %v855 = vld [vmem:[%s6 + $0x60] sm:$0xff]
    %v856 = vld [vmem:[%s6 + $0x68] sm:$0xff]
    %v857 = vld [vmem:[%s6 + $0x70] sm:$0xff]
    %v858 = vld [vmem:[%s6 + $0x78] sm:$0xff]
    %v859 = vld [vmem:[%s6 + $0x80] sm:$0xff]
    %v860 = vld [vmem:[%s6 + $0x88] sm:$0xff]
    %v861 = vld [vmem:[%s6 + $0x90] sm:$0xff]
    %v862 = vld [vmem:[%s6 + $0x98] sm:$0xff]
    %v863 = vld [vmem:[%s6 + $0xa0] sm:$0xff]
    %v864 = vld [vmem:[%s6 + $0xa8] sm:$0xff]
    %v865 = vld [vmem:[%s6 + $0xb0] sm:$0xff]
    %v866 = vld [vmem:[%s6 + $0xb8] sm:$0xff]
    %v867 = vld [vmem:[%s7] sm:$0x1]
    %v869 = vlaneseq
    %v870 = vshrl.u32 %v869, 7
    %v871 = vsub.s32 0, %v870
    %v872 = vrot.slane %v867, %v871
    %v874 = vcombine.low %v786, %v794
    %v875 = vcombine.low %v802, %v810
    %v877 = vunpack.c.l.s4 1983009808
    %v878 = vunpack.c.0.s8 %v877
    %v879 = vlaneseq
    %v880 = vshrl.u32 %v879, 7
    %v881 = vsub.s32 %v878, %v880
    %v882 = vrot.slane %v874, %v881
    %v884 = vunpack.c.l.s4 1983009808
    %v885 = vunpack.c.0.s8 %v884
    %v886 = vlaneseq
    %v887 = vshrl.u32 %v886, 7
    %v888 = vsub.s32 %v885, %v887
    %v889 = vrot.slane %v875, %v888
    %v890 = vcombine.low %v882, %v889
    %v891 = vcombine.high %v882, %v889
    %v892 = vcombine.low %v818, %v826
    %v893 = vcombine.low %v834, %v842
    %v895 = vunpack.c.l.s4 1983009808
    %v896 = vunpack.c.0.s8 %v895
    %v897 = vlaneseq
    %v898 = vshrl.u32 %v897, 7
    %v899 = vsub.s32 %v896, %v898
    %v900 = vrot.slane %v892, %v899
    %v902 = vunpack.c.l.s4 1983009808
    %v903 = vunpack.c.0.s8 %v902
    %v904 = vlaneseq
    %v905 = vshrl.u32 %v904, 7
    %v906 = vsub.s32 %v903, %v905
    %v907 = vrot.slane %v893, %v906
    %v908 = vcombine.low %v900, %v907
    %v909 = vcombine.high %v900, %v907
    %v912 = vsel %vm737, %v891, 0
    %v914 = vsel %vm737, %v909, 0
    %916 = vmatprep.subr.mxu0 0.0
    %917 = vmatpush1.msra.mxu0 %v843
    %918 = vmatprep.subr.mxu0 0.0
    %919 = vmatpush1.msra.mxu0 %v844
    %920 = vmatprep.subr.mxu0 0.0
    %921 = vmatpush1.msra.mxu0 %v845
    %922 = vmatprep.subr.mxu0 0.0
    %923 = vmatpush1.msra.mxu0 %v846
    %924 = vmatprep.subr.mxu0 0.0
    %925 = vmatpush1.msra.mxu0 %v847
    %926 = vmatprep.subr.mxu0 0.0
    %927 = vmatpush1.msra.mxu0 %v848
    %928 = vmatprep.subr.mxu0 0.0
    %929 = vmatpush1.msra.mxu0 %v849
    %930 = vmatprep.subr.mxu0 0.0
    %931 = vmatpush1.msra.mxu0 %v850
    %932 = vmatprep.subr.mxu0 0.0
    %933 = vmatpush1.msra.mxu0 %v851
    %934 = vmatprep.subr.mxu0 0.0
    %935 = vmatpush1.msra.mxu0 %v852
    %936 = vmatprep.subr.mxu0 0.0
    %937 = vmatpush1.msra.mxu0 %v853
    %938 = vmatprep.subr.mxu0 0.0
    %939 = vmatpush1.msra.mxu0 %v854
    %940 = vmatprep.subr.mxu0 0.0
    %941 = vmatpush1.msra.mxu0 %v855
    %942 = vmatprep.subr.mxu0 0.0
    %943 = vmatpush1.msra.mxu0 %v856
    %944 = vmatprep.subr.mxu0 0.0
    %945 = vmatpush1.msra.mxu0 %v857
    %946 = vmatprep.subr.mxu0 0.0
    %947 = vmatpush1.msra.mxu0 %v858
    %948 = vmatprep.subr.mxu0 0.0
    %949 = vmatpush1.msra.mxu0 %v859
    %950 = vmatprep.subr.mxu0 0.0
    %951 = vmatpush1.msra.mxu0 %v860
    %952 = vmatprep.subr.mxu0 0.0
    %953 = vmatpush1.msra.mxu0 %v861
    %954 = vmatprep.subr.mxu0 0.0
    %955 = vmatpush1.msra.mxu0 %v862
    %956 = vmatprep.subr.mxu0 0.0
    %957 = vmatpush1.msra.mxu0 %v863
    %958 = vmatprep.subr.mxu0 0.0
    %959 = vmatpush1.msra.mxu0 %v864
    %960 = vmatprep.subr.mxu0 0.0
    %961 = vmatpush1.msra.mxu0 %v865
    %962 = vmatprep.subr.mxu0 0.0
    %963 = vmatpush1.msra.mxu0 %v866
    %964 = vmatprep.subr.mxu0 0.0
    %965 = vmatpush1.msra.mxu0 0.0
    %966 = vmatprep.subr.mxu0 0.0
    %967 = vmatpush1.msra.mxu0 0.0
    %968 = vmatprep.subr.mxu0 0.0
    %969 = vmatpush1.msra.mxu0 0.0
    %970 = vmatprep.subr.mxu0 0.0
    %971 = vmatpush1.msra.mxu0 0.0
    %972 = vmatprep.subr.mxu0 0.0
    %973 = vmatpush1.msra.mxu0 0.0
    %974 = vmatprep.subr.mxu0 0.0
    %975 = vmatpush1.msra.mxu0 0.0
    %976 = vmatprep.subr.mxu0 0.0
    %977 = vmatpush1.msra.mxu0 0.0
    %978 = vmatprep.subr.mxu0 0.0
    %979 = vmatpush1.msra.mxu0 0.0
    %980 = vmatprep.mubr.f32.mxu0 %v912
    %981 = vmatmul.mubr.f32.gmra.mrb[0].mxu0 %v890
    %v982 = vpop.f32.mrb[0].mxu0
    %v983 = vadd.f32 %v872, %v982
    %v984 = vpop.f32.mrb[0].mxu0
    %985 = vmatprep.mubr.f32.mxu0 %v914
    %986 = vmatmul.mubr.f32.gmra.mrb[0].mxu0 %v908
    %v987 = vpop.f32.mrb[0].mxu0
    %v988 = vadd.f32 %v872, %v987
    %v989 = vpop.f32.mrb[0].mxu0
    %990 = vdwg.mxu0
    %v991 = vmax.f32 %v983, 0.0
    %v992 = vmax.f32 %v988, 0.0
    %v995 = vcombine.high %v991, %v991
    %v997 = vunpack.c.l.s4 1983009808
    %v998 = vunpack.c.0.s8 %v997
    %v999 = vlaneseq
    %v1000 = vshrl.u32 %v999, 7
    %v1001 = vsub.s32 %v998, %v1000
    %v1002 = vrot.slane %v991, %v1001
    %v1004 = vunpack.c.l.s4 1983009808
    %v1005 = vunpack.c.0.s8 %v1004
    %v1006 = vlaneseq
    %v1007 = vshrl.u32 %v1006, 7
    %v1008 = vsub.s32 %v1005, %v1007
    %v1009 = vrot.slane %v995, %v1008
    %v1010 = vcombine.high %v1002, %v1002
    %v1011 = vcombine.high %v1009, %v1009
    %v1012 = vcombine.high %v992, %v992
    %v1014 = vunpack.c.l.s4 1983009808
    %v1015 = vunpack.c.0.s8 %v1014
    %v1016 = vlaneseq
    %v1017 = vshrl.u32 %v1016, 7
    %v1018 = vsub.s32 %v1015, %v1017
    %v1019 = vrot.slane %v992, %v1018
    %v1021 = vunpack.c.l.s4 1983009808
    %v1022 = vunpack.c.0.s8 %v1021
    %v1023 = vlaneseq
    %v1024 = vshrl.u32 %v1023, 7
    %v1025 = vsub.s32 %v1022, %v1024
    %v1026 = vrot.slane %v1012, %v1025
    %v1027 = vcombine.high %v1019, %v1019
    %v1028 = vcombine.high %v1026, %v1026
    %vm1037 = vcmp.gt.s32.totalorder %v251, 0
    %vm1038 = vcmp.gt.s32.totalorder %v251, 1
    %vm1039 = vcmp.gt.s32.totalorder %v251, 2
    %vm1040 = vcmp.gt.s32.totalorder %v251, 3
    %vm1041 = vcmp.gt.s32.totalorder %v251, 4
    %vm1042 = vcmp.gt.s32.totalorder %v251, 5
    %vm1043 = vcmp.gt.s32.totalorder %v251, 6
    %vm1044 = vcmp.gt.s32.totalorder %v251, 7
    %v1045 = vsel %vm1037, 1, 0
    %v1046 = vsel %vm1038, 1, 0
    %v1047 = vsel %vm1039, 1, 0
    %v1048 = vsel %vm1040, 1, 0
    %v1049 = vsel %vm1041, 1, 0
    %v1050 = vsel %vm1042, 1, 0
    %v1051 = vsel %vm1043, 1, 0
    %v1052 = vsel %vm1044, 1, 0
    %1053 = vset.pattern.permute.xlu0 0
    %1054 = vperm.xlu0 %1053, %v1045
    %v1055 = vpop.permute.xlu0 %1054
    %1056 = vset.pattern.permute.xlu0 0
    %1057 = vperm.xlu0 %1056, %v1046
    %v1058 = vpop.permute.xlu0 %1057
    %1059 = vset.pattern.permute.xlu0 0
    %1060 = vperm.xlu0 %1059, %v1047
    %v1061 = vpop.permute.xlu0 %1060
    %1062 = vset.pattern.permute.xlu0 0
    %1063 = vperm.xlu0 %1062, %v1048
    %v1064 = vpop.permute.xlu0 %1063
    %1065 = vset.pattern.permute.xlu0 0
    %1066 = vperm.xlu0 %1065, %v1049
    %v1067 = vpop.permute.xlu0 %1066
    %1068 = vset.pattern.permute.xlu0 0
    %1069 = vperm.xlu0 %1068, %v1050
    %v1070 = vpop.permute.xlu0 %1069
    %1071 = vset.pattern.permute.xlu0 0
    %1072 = vperm.xlu0 %1071, %v1051
    %v1073 = vpop.permute.xlu0 %1072
    %1074 = vset.pattern.permute.xlu0 0
    %1075 = vperm.xlu0 %1074, %v1052
    %v1076 = vpop.permute.xlu0 %1075
    %vm1077 = vcmp.eq.s32.totalorder %v1055, 1
    %vm1078 = vcmp.eq.s32.totalorder %v1058, 1
    %vm1079 = vcmp.eq.s32.totalorder %v1061, 1
    %vm1080 = vcmp.eq.s32.totalorder %v1064, 1
    %vm1081 = vcmp.eq.s32.totalorder %v1067, 1
    %vm1082 = vcmp.eq.s32.totalorder %v1070, 1
    %vm1083 = vcmp.eq.s32.totalorder %v1073, 1
    %vm1084 = vcmp.eq.s32.totalorder %v1076, 1
    %v1085 = vsel %vm1077, %v1002, -1.0
    %v1086 = vsel %vm1078, %v1010, -1.0
    %v1087 = vsel %vm1079, %v1009, -1.0
    %v1088 = vsel %vm1080, %v1011, -1.0
    %v1089 = vsel %vm1081, %v1019, -1.0
    %v1090 = vsel %vm1082, %v1027, -1.0
    %v1091 = vsel %vm1083, %v1026, -1.0
    %v1092 = vsel %vm1084, %v1028, -1.0
    %v1093 = vsel %vm244, %v1085, -inf
    %v1094 = vsel %vm244, %v1086, -inf
    %v1095 = vsel %vm244, %v1087, -inf
    %v1096 = vsel %vm244, %v1088, -inf
    %v1097 = vsel %vm244, %v1089, -inf
    %v1098 = vmax.f32 %v1093, %v1097
    %v1099 = vsel %vm244, %v1090, -inf
    %v1100 = vmax.f32 %v1094, %v1099
    %v1101 = vsel %vm244, %v1091, -inf
    %v1102 = vmax.f32 %v1095, %v1101
    %v1103 = vsel %vm244, %v1092, -inf
    %v1104 = vmax.f32 %v1096, %v1103
    %v1105 = vmax.f32 %v1098, %v1100
    %v1106 = vmax.f32 %v1102, %v1104
    %v1107 = vmax.f32 %v1105, %v1106
    %v1108 = vld [vmem:[%s8] sm:$0xff]
    %v1109 = vld [vmem:[%s8 + $0x8] sm:$0xff]
    %v1110 = vld [vmem:[%s8 + $0x10] sm:$0xff]
    %v1111 = vld [vmem:[%s8 + $0x18] sm:$0xff]
    %v1112 = vld [vmem:[%s9] sm:$0x1]
    %v1114 = vlaneseq
    %v1115 = vshrl.u32 %v1114, 7
    %v1116 = vsub.s32 0, %v1115
    %v1117 = vrot.slane %v1112, %v1116
    %v1120 = vsel %vm106, %v1107, 0
    %1122 = vmatprep.subr.mxu0 0.0
    %1123 = vmatpush1.msra.mxu0 %v1108
    %1124 = vmatprep.subr.mxu0 0.0
    %1125 = vmatpush1.msra.mxu0 %v1109
    %1126 = vmatprep.subr.mxu0 0.0
    %1127 = vmatpush1.msra.mxu0 %v1110
    %1128 = vmatprep.subr.mxu0 0.0
    %1129 = vmatpush1.msra.mxu0 %v1111
    %1130 = vmatprep.subr.mxu0 0.0
    %1131 = vmatpush1.msra.mxu0 0.0
    %1132 = vmatprep.subr.mxu0 0.0
    %1133 = vmatpush1.msra.mxu0 0.0
    %1134 = vmatprep.subr.mxu0 0.0
    %1135 = vmatpush1.msra.mxu0 0.0
    %1136 = vmatprep.subr.mxu0 0.0
    %1137 = vmatpush1.msra.mxu0 0.0
    %1138 = vmatprep.subr.mxu0 0.0
    %1139 = vmatpush1.msra.mxu0 0.0
    %1140 = vmatprep.subr.mxu0 0.0
    %1141 = vmatpush1.msra.mxu0 0.0
    %1142 = vmatprep.subr.mxu0 0.0
    %1143 = vmatpush1.msra.mxu0 0.0
    %1144 = vmatprep.subr.mxu0 0.0
    %1145 = vmatpush1.msra.mxu0 0.0
    %1146 = vmatprep.subr.mxu0 0.0
    %1147 = vmatpush1.msra.mxu0 0.0
    %1148 = vmatprep.subr.mxu0 0.0
    %1149 = vmatpush1.msra.mxu0 0.0
    %1150 = vmatprep.subr.mxu0 0.0
    %1151 = vmatpush1.msra.mxu0 0.0
    %1152 = vmatprep.subr.mxu0 0.0
    %1153 = vmatpush1.msra.mxu0 0.0
    %1154 = vmatprep.subr.mxu0 0.0
    %1155 = vmatpush1.msra.mxu0 0.0
    %1156 = vmatprep.subr.mxu0 0.0
    %1157 = vmatpush1.msra.mxu0 0.0
    %1158 = vmatprep.subr.mxu0 0.0
    %1159 = vmatpush1.msra.mxu0 0.0
    %1160 = vmatprep.subr.mxu0 0.0
    %1161 = vmatpush1.msra.mxu0 0.0
    %1162 = vmatprep.subr.mxu0 0.0
    %1163 = vmatpush1.msra.mxu0 0.0
    %1164 = vmatprep.subr.mxu0 0.0
    %1165 = vmatpush1.msra.mxu0 0.0
    %1166 = vmatprep.subr.mxu0 0.0
    %1167 = vmatpush1.msra.mxu0 0.0
    %1168 = vmatprep.subr.mxu0 0.0
    %1169 = vmatpush1.msra.mxu0 0.0
    %1170 = vmatprep.subr.mxu0 0.0
    %1171 = vmatpush1.msra.mxu0 0.0
    %1172 = vmatprep.subr.mxu0 0.0
    %1173 = vmatpush1.msra.mxu0 0.0
    %1174 = vmatprep.subr.mxu0 0.0
    %1175 = vmatpush1.msra.mxu0 0.0
    %1176 = vmatprep.subr.mxu0 0.0
    %1177 = vmatpush1.msra.mxu0 0.0
    %1178 = vmatprep.subr.mxu0 0.0
    %1179 = vmatpush1.msra.mxu0 0.0
    %1180 = vmatprep.subr.mxu0 0.0
    %1181 = vmatpush1.msra.mxu0 0.0
    %1182 = vmatprep.subr.mxu0 0.0
    %1183 = vmatpush1.msra.mxu0 0.0
    %1184 = vmatprep.subr.mxu0 0.0
    %1185 = vmatpush1.msra.mxu0 0.0
    %1186 = vmatprep.mubr.f32.mxu0 0.0
    %1187 = vmatmul.mubr.f32.gmra.mrb[0].mxu0 %v1120
    %v1188 = vpop.f32.mrb[0].mxu0
    %v1189 = vadd.f32 %v1117, %v1188
    %v1190 = vpop.f32.mrb[0].mxu0
    %1191 = vdwg.mxu0
    %1192 = vst [vmem:[#allocation5] sm:$0x3] %v1189
    // Predicated region
    $region49: #{tpu_custom_call.1} parent=1 // pred_check
      _
    $region50: #{tpu_custom_call.1} parent=1 // pred_check_branch
      %1194 = sbr.rel (0) target = $region52
    $region51: #{tpu_custom_call.1} parent=1 // pred_region
      %s1196 = ssub.s32 32, 32
      %1197 = vsyncadd [#allocation6], %s1196
      %s1199 = sshll.u32 [#allocation5], 4
      %s1200 = int_to_ptr.vmem [resolvable:$true] %s1199
      %1202 = dma.vmem_to_hbm [thread:$0]  %s1200, 32, %s10, [#allocation6]
    $region52: #{tpu_custom_call.1} parent=1 // pred_fallthru
      _
    // Predicated region
    $region53: #{tpu_custom_call.1} parent=1 // pred_check
      _
    $region54: #{tpu_custom_call.1} parent=1 // pred_check_branch
      %1204 = sbr.rel (0) target = $region56
    $region55: #{tpu_custom_call.1} parent=1 // pred_region
      %1205 = dma.done [#allocation6], 32
    $region56: #{tpu_custom_call.1} parent=1 // pred_fallthru
      _
    %1206 = vsyncpa [#allocation6], 1

</llo_original>
